<compile_context>
chip_gen: v7x
topology: tpu7x:2x2x1
jax: 0.10.0
libtpu: 0.0.40
codegen_flags: <defaults>
</compile_context>

<pallas_src>
import functools

import jax
import jax.numpy as jnp
from jax.experimental import pallas as pl
from jax.experimental.pallas import tpu as pltpu

H = 128  # universal padded feature width (full MXU lane width)


# -----------------------------------------------------------------------------
# Fused Pallas kernel: full forward pass
# -----------------------------------------------------------------------------
def _fused_gnn_kernel(batch_ref, a_ref, x_ref, w_ref, b_ref, out_ref, *,
                      num_graphs, sg_hops):
    # a_ref : (N_pad, N_pad) bf16   normalized adjacency A_hat (zero-padded)
    # x_ref : (N_pad, H)     bf16   node features (zero-padded lanes)
    # w_ref : (9, H, H)      bf16   [enc1, enc2, gcn1, gcn2, gcn3, sg, fc1, fc2, head]
    # b_ref : (9, H)         f32    matching biases (zero-padded)
    # batch_ref : (N_pad, 1) i32    node -> graph id (-1 for padded rows)
    # out_ref   : (G_pad, H) f32    col 0 = cpd_pred, col 1 = comb_logits
    a = a_ref[...]                                    # stays resident in vregs/VMEM

    def gcn(h_bf16, idx, relu):
        # GCNConv: A_hat @ (X @ W) + b   (bf16 operands, f32 accumulation)
        xw = jnp.dot(h_bf16, w_ref[idx], preferred_element_type=jnp.float32)
        out = jnp.dot(a, xw.astype(jnp.bfloat16),
                      preferred_element_type=jnp.float32) + b_ref[idx:idx + 1, :]
        if relu:
            out = jnp.maximum(out, 0.0)
        return out.astype(jnp.bfloat16)

    h = x_ref[...]
    h = gcn(h, 0, True)     # encoder conv1 + ReLU
    h = gcn(h, 1, False)    # encoder conv2
    h = gcn(h, 2, True)     # gcn1 + ReLU
    h = gcn(h, 3, True)     # gcn2 + ReLU
    h = gcn(h, 4, True)     # gcn3 + ReLU

    # SGConv: (A_hat^K @ h) @ W + b      (K static -> unrolled)
    for _ in range(sg_hops):
        h = jnp.dot(a, h, preferred_element_type=jnp.float32).astype(jnp.bfloat16)
    z = jnp.dot(h, w_ref[5], preferred_element_type=jnp.float32) + b_ref[5:6, :]
    # z: (N_pad, H) f32

    # ---- global_max_pool: per-graph segment max (no (G,N,D) temporary) ----
    neg = jnp.finfo(jnp.float32).min           # empty graphs would yield f32-min
    batch_ids = batch_ref[...]                 # (N_pad, 1) int32
    g_pad = out_ref.shape[0]
    g_rows = jax.lax.broadcasted_iota(jnp.int32, (g_pad, 1), 0)

    def pool_body(g, pooled):
        member = batch_ids == g                                   # (N_pad, 1)
        seg_max = jnp.max(jnp.where(member, z, neg), axis=0, keepdims=True)  # (1,H)
        return jnp.where(g_rows == g, seg_max, pooled)

    pooled = jax.lax.fori_loop(0, num_graphs, pool_body,
                               jnp.zeros((g_pad, H), jnp.float32))

    # ---- MLP head: fc1 -> ReLU -> fc2 -> ReLU -> [cpd | comb] fused ----
    hh = jnp.maximum(
        jnp.dot(pooled.astype(jnp.bfloat16), w_ref[6],
                preferred_element_type=jnp.float32) + b_ref[6:7, :], 0.0)
    hh = jnp.maximum(
        jnp.dot(hh.astype(jnp.bfloat16), w_ref[7],
                preferred_element_type=jnp.float32) + b_ref[7:8, :], 0.0)
    out_ref[...] = jnp.dot(hh.astype(jnp.bfloat16), w_ref[8],
                           preferred_element_type=jnp.float32) + b_ref[8:9, :]


# -----------------------------------------------------------------------------
# Wrapper
# -----------------------------------------------------------------------------
_VMEM = pl.BlockSpec(memory_space=pltpu.MemorySpace.VMEM)


def _round_up(x, m):
    return (x + m - 1) // m * m


def _pad_weight(w):
    fi, fo = w.shape
    return jnp.zeros((H, H), jnp.float32).at[:fi, :fo].set(w)


def _pad_bias(b):
    return jnp.zeros((H,), jnp.float32).at[:b.shape[0]].set(b)


def _pack_params(params):
    """Stack all layer weights/biases, zero-padded to 128 lanes (bf16 weights)."""
    head_w = jnp.concatenate([params["cpd_w"], params["comb_w"]], axis=1)   # (16, 2)
    head_b = jnp.concatenate([params["cpd_b"], params["comb_b"]], axis=0)   # (2,)
    order = ["enc1", "enc2", "gcn1", "gcn2", "gcn3", "sg", "fc1", "fc2"]
    ws = [_pad_weight(params[k + "_w"]) for k in order] + [_pad_weight(head_w)]
    bs = [_pad_bias(params[k + "_b"]) for k in order] + [_pad_bias(head_b)]
    w_all = jnp.stack(ws, axis=0).astype(jnp.bfloat16)   # (9, H, H) bf16
    b_all = jnp.stack(bs, axis=0)                        # (9, H)    f32
    return w_all, b_all


def gnn_regressor_forward(params, x, edge_index, batch, num_graphs):
    n, f = x.shape
    n_pad = _round_up(n, 8)
    g_pad = _round_up(num_graphs, 8)

    a_hat = normalized_adjacency(edge_index, n)                         # (n, n) f32
    a_pad = (jnp.zeros((n_pad, n_pad), jnp.float32)
             .at[:n, :n].set(a_hat).astype(jnp.bfloat16))
    x_pad = (jnp.zeros((n_pad, H), jnp.float32)
             .at[:n, :f].set(x).astype(jnp.bfloat16))
    batch_ids = (jnp.full((n_pad, 1), -1, jnp.int32)
                 .at[:n, 0].set(batch.astype(jnp.int32)))

    w_all, b_all = _pack_params(params)

    out = pl.pallas_call(
        functools.partial(_fused_gnn_kernel, num_graphs=num_graphs, sg_hops=4),
        out_shape=jax.ShapeDtypeStruct((g_pad, H), jnp.float32),
        in_specs=[_VMEM] * 5,
        out_specs=_VMEM,
    )(batch_ids, a_pad, x_pad, w_all, b_all)

    cpd_pred = out[:num_graphs, 0:1]
    comb_logits = out[:num_graphs, 1:2]
    return cpd_pred, comb_logits


# -----------------------------------------------------------------------------
# Graph preprocessing (plain-JAX glue)
# -----------------------------------------------------------------------------
def normalized_adjacency(edge_index, num_nodes):
    """Dense PyG-style gcn_norm: D^-1/2 (A + I) D^-1/2 with A[dst, src] = 1."""
    src, dst = edge_index[0], edge_index[1]
    a = jnp.zeros((num_nodes, num_nodes), jnp.float32)
    a = a.at[dst, src].add(1.0)
    a = a + jnp.eye(num_nodes, dtype=jnp.float32)
    deg = a.sum(axis=1)
    d_inv_sqrt = jnp.where(deg > 0, 1.0 / jnp.sqrt(deg), 0.0)
    return d_inv_sqrt[:, None] * a * d_inv_sqrt[None, :]


# -----------------------------------------------------------------------------
# Parameter init (deterministic; weights stored as [fan_in, fan_out], f32)
# -----------------------------------------------------------------------------
def init_params(key, in_channels):
    dims = {
        "enc1": (in_channels, 128), "enc2": (128, 64),
        "gcn1": (64, 64), "gcn2": (64, 64), "gcn3": (64, 64),
        "sg":   (64, 64),
        "fc1":  (64, 32), "fc2": (32, 16),
        "cpd":  (16, 1),  "comb": (16, 1),
    }
    params = {}
    keys = jax.random.split(key, len(dims))
    for k, (name, (fi, fo)) in zip(keys, dims.items()):
        scale = 1.0 / jnp.sqrt(jnp.float32(fi))
        params[name + "_w"] = scale * jax.random.normal(k, (fi, fo), jnp.float32)
        params[name + "_b"] = jnp.zeros((fo,), jnp.float32)
    return params


# -----------------------------------------------------------------------------
# Demo
# -----------------------------------------------------------------------------
if __name__ == "__main__":
    key = jax.random.PRNGKey(0)
    k_param, k_x = jax.random.split(key)

    num_features = 16
    nodes_per_graph = 8
    num_graphs = 2
    n = nodes_per_graph * num_graphs  # 16 nodes total

    # node features
    x = jax.random.normal(k_x, (n, num_features), jnp.float32)

    # undirected ring within each graph
    srcs, dsts = [], []
    for g in range(num_graphs):
        base = g * nodes_per_graph
        for i in range(nodes_per_graph):
            u, v = base + i, base + (i + 1) % nodes_per_graph
            srcs += [u, v]
            dsts += [v, u]
    edge_index = jnp.array([srcs, dsts], dtype=jnp.int32)

    # graph membership vector
    batch = jnp.repeat(jnp.arange(num_graphs, dtype=jnp.int32), nodes_per_graph)

    params = init_params(k_param, num_features)

    cpd_pred, comb_logits = gnn_regressor_forward(params, x, edge_index, batch, num_graphs)
    jax.block_until_ready((cpd_pred, comb_logits))

    assert cpd_pred.shape == (num_graphs, 1) and comb_logits.shape == (num_graphs, 1)
    assert bool(jnp.all(jnp.isfinite(cpd_pred))) and bool(jnp.all(jnp.isfinite(comb_logits)))
    print("KERNEL_OK")
</pallas_src>

<mosaic_0001>
module attributes {stable_mosaic.version = 11 : i64} {
  func.func @_fused_gnn_kernel(%arg0: memref<16x1xi32, #tpu.memory_space<vmem>>, %arg1: memref<16x16xbf16, #tpu.memory_space<vmem>>, %arg2: memref<16x128xbf16, #tpu.memory_space<vmem>>, %arg3: memref<9x128x128xbf16, #tpu.memory_space<vmem>>, %arg4: memref<9x128xf32, #tpu.memory_space<vmem>>, %arg5: memref<8x128xf32, #tpu.memory_space<vmem>>) attributes {dimension_semantics = [], scalar_prefetch = 0 : i64, scratch_operands = 0 : i64, tpu.core_type = #tpu.core_type<tc>} {
    %c0 = arith.constant 0 : index
    %c0_0 = arith.constant 0 : index
    %0 = vector.load %arg1[%c0, %c0_0] : memref<16x16xbf16, #tpu.memory_space<vmem>>, vector<16x16xbf16>
    %c0_1 = arith.constant 0 : index
    %c0_2 = arith.constant 0 : index
    %1 = vector.load %arg2[%c0_1, %c0_2] : memref<16x128xbf16, #tpu.memory_space<vmem>>, vector<16x128xbf16>
    %c0_3 = arith.constant 0 : index
    %c0_4 = arith.constant 0 : index
    %c0_5 = arith.constant 0 : index
    %2 = vector.load %arg3[%c0_3, %c0_4, %c0_5] : memref<9x128x128xbf16, #tpu.memory_space<vmem>>, vector<1x128x128xbf16>
    %3 = vector.shape_cast %2 : vector<1x128x128xbf16> to vector<128x128xbf16>
    %cst = arith.constant dense<0.000000e+00> : vector<16x128xf32>
    %4 = tpu.matmul %1, %3, %cst {dimension_numbers = #tpu.dot_dimension_numbers<[1], [0], [0], [1], [0, 0, 1, 1], [], []>} : vector<16x128xbf16>, vector<128x128xbf16>, vector<16x128xf32> -> vector<16x128xf32>
    %5 = arith.truncf %4 : vector<16x128xf32> to vector<16x128xbf16>
    %cst_6 = arith.constant dense<0.000000e+00> : vector<16x128xf32>
    %6 = tpu.matmul %0, %5, %cst_6 {dimension_numbers = #tpu.dot_dimension_numbers<[1], [0], [0], [1], [0, 0, 1, 1], [], []>} : vector<16x16xbf16>, vector<16x128xbf16>, vector<16x128xf32> -> vector<16x128xf32>
    %c0_7 = arith.constant 0 : index
    %c0_8 = arith.constant 0 : index
    %7 = vector.load %arg4[%c0_7, %c0_8] : memref<9x128xf32, #tpu.memory_space<vmem>>, vector<1x128xf32>
    %8 = vector.broadcast %7 : vector<1x128xf32> to vector<16x128xf32>
    %9 = arith.addf %6, %8 : vector<16x128xf32>
    %cst_9 = arith.constant 0.000000e+00 : f32
    %10 = vector.broadcast %cst_9 : f32 to vector<16x128xf32>
    %11 = arith.maximumf %9, %10 : vector<16x128xf32>
    %12 = arith.truncf %11 : vector<16x128xf32> to vector<16x128xbf16>
    %c1 = arith.constant 1 : index
    %c0_10 = arith.constant 0 : index
    %c0_11 = arith.constant 0 : index
    %13 = vector.load %arg3[%c1, %c0_10, %c0_11] : memref<9x128x128xbf16, #tpu.memory_space<vmem>>, vector<1x128x128xbf16>
    %14 = vector.shape_cast %13 : vector<1x128x128xbf16> to vector<128x128xbf16>
    %cst_12 = arith.constant dense<0.000000e+00> : vector<16x128xf32>
    %15 = tpu.matmul %12, %14, %cst_12 {dimension_numbers = #tpu.dot_dimension_numbers<[1], [0], [0], [1], [0, 0, 1, 1], [], []>} : vector<16x128xbf16>, vector<128x128xbf16>, vector<16x128xf32> -> vector<16x128xf32>
    %16 = arith.truncf %15 : vector<16x128xf32> to vector<16x128xbf16>
    %cst_13 = arith.constant dense<0.000000e+00> : vector<16x128xf32>
    %17 = tpu.matmul %0, %16, %cst_13 {dimension_numbers = #tpu.dot_dimension_numbers<[1], [0], [0], [1], [0, 0, 1, 1], [], []>} : vector<16x16xbf16>, vector<16x128xbf16>, vector<16x128xf32> -> vector<16x128xf32>
    %c1_14 = arith.constant 1 : index
    %c0_15 = arith.constant 0 : index
    %18 = vector.load %arg4[%c1_14, %c0_15] : memref<9x128xf32, #tpu.memory_space<vmem>>, vector<1x128xf32>
    %19 = vector.broadcast %18 : vector<1x128xf32> to vector<16x128xf32>
    %20 = arith.addf %17, %19 : vector<16x128xf32>
    %21 = arith.truncf %20 : vector<16x128xf32> to vector<16x128xbf16>
    %c2 = arith.constant 2 : index
    %c0_16 = arith.constant 0 : index
    %c0_17 = arith.constant 0 : index
    %22 = vector.load %arg3[%c2, %c0_16, %c0_17] : memref<9x128x128xbf16, #tpu.memory_space<vmem>>, vector<1x128x128xbf16>
    %23 = vector.shape_cast %22 : vector<1x128x128xbf16> to vector<128x128xbf16>
    %cst_18 = arith.constant dense<0.000000e+00> : vector<16x128xf32>
    %24 = tpu.matmul %21, %23, %cst_18 {dimension_numbers = #tpu.dot_dimension_numbers<[1], [0], [0], [1], [0, 0, 1, 1], [], []>} : vector<16x128xbf16>, vector<128x128xbf16>, vector<16x128xf32> -> vector<16x128xf32>
    %25 = arith.truncf %24 : vector<16x128xf32> to vector<16x128xbf16>
    %cst_19 = arith.constant dense<0.000000e+00> : vector<16x128xf32>
    %26 = tpu.matmul %0, %25, %cst_19 {dimension_numbers = #tpu.dot_dimension_numbers<[1], [0], [0], [1], [0, 0, 1, 1], [], []>} : vector<16x16xbf16>, vector<16x128xbf16>, vector<16x128xf32> -> vector<16x128xf32>
    %c2_20 = arith.constant 2 : index
    %c0_21 = arith.constant 0 : index
    %27 = vector.load %arg4[%c2_20, %c0_21] : memref<9x128xf32, #tpu.memory_space<vmem>>, vector<1x128xf32>
    %28 = vector.broadcast %27 : vector<1x128xf32> to vector<16x128xf32>
    %29 = arith.addf %26, %28 : vector<16x128xf32>
    %cst_22 = arith.constant 0.000000e+00 : f32
    %30 = vector.broadcast %cst_22 : f32 to vector<16x128xf32>
    %31 = arith.maximumf %29, %30 : vector<16x128xf32>
    %32 = arith.truncf %31 : vector<16x128xf32> to vector<16x128xbf16>
    %c3 = arith.constant 3 : index
    %c0_23 = arith.constant 0 : index
    %c0_24 = arith.constant 0 : index
    %33 = vector.load %arg3[%c3, %c0_23, %c0_24] : memref<9x128x128xbf16, #tpu.memory_space<vmem>>, vector<1x128x128xbf16>
    %34 = vector.shape_cast %33 : vector<1x128x128xbf16> to vector<128x128xbf16>
    %cst_25 = arith.constant dense<0.000000e+00> : vector<16x128xf32>
    %35 = tpu.matmul %32, %34, %cst_25 {dimension_numbers = #tpu.dot_dimension_numbers<[1], [0], [0], [1], [0, 0, 1, 1], [], []>} : vector<16x128xbf16>, vector<128x128xbf16>, vector<16x128xf32> -> vector<16x128xf32>
    %36 = arith.truncf %35 : vector<16x128xf32> to vector<16x128xbf16>
    %cst_26 = arith.constant dense<0.000000e+00> : vector<16x128xf32>
    %37 = tpu.matmul %0, %36, %cst_26 {dimension_numbers = #tpu.dot_dimension_numbers<[1], [0], [0], [1], [0, 0, 1, 1], [], []>} : vector<16x16xbf16>, vector<16x128xbf16>, vector<16x128xf32> -> vector<16x128xf32>
    %c3_27 = arith.constant 3 : index
    %c0_28 = arith.constant 0 : index
    %38 = vector.load %arg4[%c3_27, %c0_28] : memref<9x128xf32, #tpu.memory_space<vmem>>, vector<1x128xf32>
    %39 = vector.broadcast %38 : vector<1x128xf32> to vector<16x128xf32>
    %40 = arith.addf %37, %39 : vector<16x128xf32>
    %cst_29 = arith.constant 0.000000e+00 : f32
    %41 = vector.broadcast %cst_29 : f32 to vector<16x128xf32>
    %42 = arith.maximumf %40, %41 : vector<16x128xf32>
    %43 = arith.truncf %42 : vector<16x128xf32> to vector<16x128xbf16>
    %c4 = arith.constant 4 : index
    %c0_30 = arith.constant 0 : index
    %c0_31 = arith.constant 0 : index
    %44 = vector.load %arg3[%c4, %c0_30, %c0_31] : memref<9x128x128xbf16, #tpu.memory_space<vmem>>, vector<1x128x128xbf16>
    %45 = vector.shape_cast %44 : vector<1x128x128xbf16> to vector<128x128xbf16>
    %cst_32 = arith.constant dense<0.000000e+00> : vector<16x128xf32>
    %46 = tpu.matmul %43, %45, %cst_32 {dimension_numbers = #tpu.dot_dimension_numbers<[1], [0], [0], [1], [0, 0, 1, 1], [], []>} : vector<16x128xbf16>, vector<128x128xbf16>, vector<16x128xf32> -> vector<16x128xf32>
    %47 = arith.truncf %46 : vector<16x128xf32> to vector<16x128xbf16>
    %cst_33 = arith.constant dense<0.000000e+00> : vector<16x128xf32>
    %48 = tpu.matmul %0, %47, %cst_33 {dimension_numbers = #tpu.dot_dimension_numbers<[1], [0], [0], [1], [0, 0, 1, 1], [], []>} : vector<16x16xbf16>, vector<16x128xbf16>, vector<16x128xf32> -> vector<16x128xf32>
    %c4_34 = arith.constant 4 : index
    %c0_35 = arith.constant 0 : index
    %49 = vector.load %arg4[%c4_34, %c0_35] : memref<9x128xf32, #tpu.memory_space<vmem>>, vector<1x128xf32>
    %50 = vector.broadcast %49 : vector<1x128xf32> to vector<16x128xf32>
    %51 = arith.addf %48, %50 : vector<16x128xf32>
    %cst_36 = arith.constant 0.000000e+00 : f32
    %52 = vector.broadcast %cst_36 : f32 to vector<16x128xf32>
    %53 = arith.maximumf %51, %52 : vector<16x128xf32>
    %54 = arith.truncf %53 : vector<16x128xf32> to vector<16x128xbf16>
    %cst_37 = arith.constant dense<0.000000e+00> : vector<16x128xf32>
    %55 = tpu.matmul %0, %54, %cst_37 {dimension_numbers = #tpu.dot_dimension_numbers<[1], [0], [0], [1], [0, 0, 1, 1], [], []>} : vector<16x16xbf16>, vector<16x128xbf16>, vector<16x128xf32> -> vector<16x128xf32>
    %56 = arith.truncf %55 : vector<16x128xf32> to vector<16x128xbf16>
    %cst_38 = arith.constant dense<0.000000e+00> : vector<16x128xf32>
    %57 = tpu.matmul %0, %56, %cst_38 {dimension_numbers = #tpu.dot_dimension_numbers<[1], [0], [0], [1], [0, 0, 1, 1], [], []>} : vector<16x16xbf16>, vector<16x128xbf16>, vector<16x128xf32> -> vector<16x128xf32>
    %58 = arith.truncf %57 : vector<16x128xf32> to vector<16x128xbf16>
    %cst_39 = arith.constant dense<0.000000e+00> : vector<16x128xf32>
    %59 = tpu.matmul %0, %58, %cst_39 {dimension_numbers = #tpu.dot_dimension_numbers<[1], [0], [0], [1], [0, 0, 1, 1], [], []>} : vector<16x16xbf16>, vector<16x128xbf16>, vector<16x128xf32> -> vector<16x128xf32>
    %60 = arith.truncf %59 : vector<16x128xf32> to vector<16x128xbf16>
    %cst_40 = arith.constant dense<0.000000e+00> : vector<16x128xf32>
    %61 = tpu.matmul %0, %60, %cst_40 {dimension_numbers = #tpu.dot_dimension_numbers<[1], [0], [0], [1], [0, 0, 1, 1], [], []>} : vector<16x16xbf16>, vector<16x128xbf16>, vector<16x128xf32> -> vector<16x128xf32>
    %62 = arith.truncf %61 : vector<16x128xf32> to vector<16x128xbf16>
    %c5 = arith.constant 5 : index
    %c0_41 = arith.constant 0 : index
    %c0_42 = arith.constant 0 : index
    %63 = vector.load %arg3[%c5, %c0_41, %c0_42] : memref<9x128x128xbf16, #tpu.memory_space<vmem>>, vector<1x128x128xbf16>
    %64 = vector.shape_cast %63 : vector<1x128x128xbf16> to vector<128x128xbf16>
    %cst_43 = arith.constant dense<0.000000e+00> : vector<16x128xf32>
    %65 = tpu.matmul %62, %64, %cst_43 {dimension_numbers = #tpu.dot_dimension_numbers<[1], [0], [0], [1], [0, 0, 1, 1], [], []>} : vector<16x128xbf16>, vector<128x128xbf16>, vector<16x128xf32> -> vector<16x128xf32>
    %c5_44 = arith.constant 5 : index
    %c0_45 = arith.constant 0 : index
    %66 = vector.load %arg4[%c5_44, %c0_45] : memref<9x128xf32, #tpu.memory_space<vmem>>, vector<1x128xf32>
    %67 = vector.broadcast %66 : vector<1x128xf32> to vector<16x128xf32>
    %68 = arith.addf %65, %67 : vector<16x128xf32>
    %c0_46 = arith.constant 0 : index
    %c0_47 = arith.constant 0 : index
    %69 = vector.load %arg0[%c0_46, %c0_47] : memref<16x1xi32, #tpu.memory_space<vmem>>, vector<16x1xi32>
    %70 = tpu.iota {dimensions = array<i32: 0>} : vector<8x1xi32>
    %cst_48 = arith.constant 0.000000e+00 : f32
    %71 = vector.broadcast %cst_48 : f32 to vector<8x128xf32>
    %c0_i32 = arith.constant 0 : i32
    %c2_i32 = arith.constant 2 : i32
    %72 = arith.addi %c0_i32, %c2_i32 : i32
    %c1_i32 = arith.constant 1 : i32
    %73 = scf.for %arg6 = %c0_i32 to %72 step %c1_i32 iter_args(%arg7 = %71) -> (vector<8x128xf32>)  : i32 {
      %100 = vector.broadcast %arg6 : i32 to vector<16x1xi32>
      %101 = arith.cmpi eq, %69, %100 : vector<16x1xi32>
      %cst_69 = arith.constant -3.40282347E+38 : f32
      %102 = vector.shape_cast %101 : vector<16x1xi1> to vector<16x1xi1>
      %103 = vector.broadcast %102 : vector<16x1xi1> to vector<16x128xi1>
      %104 = vector.broadcast %cst_69 : f32 to vector<16x128xf32>
      %105 = arith.select %103, %68, %104 : vector<16x128xi1>, vector<16x128xf32>
      %cst_70 = arith.constant dense<0xFF800000> : vector<128xf32>
      %106 = vector.multi_reduction <maximumf>, %105, %cst_70 [0] : vector<16x128xf32> to vector<128xf32>
      %107 = vector.shape_cast %106 : vector<128xf32> to vector<1x128xf32>
      %108 = vector.broadcast %arg6 : i32 to vector<8x1xi32>
      %109 = arith.cmpi eq, %70, %108 : vector<8x1xi32>
      %110 = vector.shape_cast %109 : vector<8x1xi1> to vector<8x1xi1>
      %111 = vector.broadcast %110 : vector<8x1xi1> to vector<8x128xi1>
      %112 = vector.shape_cast %107 : vector<1x128xf32> to vector<1x128xf32>
      %113 = vector.broadcast %112 : vector<1x128xf32> to vector<8x128xf32>
      %114 = arith.select %111, %113, %arg7 : vector<8x128xi1>, vector<8x128xf32>
      scf.yield %114 : vector<8x128xf32>
    }
    %c2_i32_49 = arith.constant 2 : i32
    %74 = arith.truncf %73 : vector<8x128xf32> to vector<8x128xbf16>
    %c6 = arith.constant 6 : index
    %c0_50 = arith.constant 0 : index
    %c0_51 = arith.constant 0 : index
    %75 = vector.load %arg3[%c6, %c0_50, %c0_51] : memref<9x128x128xbf16, #tpu.memory_space<vmem>>, vector<1x128x128xbf16>
    %76 = vector.shape_cast %75 : vector<1x128x128xbf16> to vector<128x128xbf16>
    %cst_52 = arith.constant dense<0.000000e+00> : vector<8x128xf32>
    %77 = tpu.matmul %74, %76, %cst_52 {dimension_numbers = #tpu.dot_dimension_numbers<[1], [0], [0], [1], [0, 0, 1, 1], [], []>} : vector<8x128xbf16>, vector<128x128xbf16>, vector<8x128xf32> -> vector<8x128xf32>
    %c6_53 = arith.constant 6 : index
    %c0_54 = arith.constant 0 : index
    %78 = vector.load %arg4[%c6_53, %c0_54] : memref<9x128xf32, #tpu.memory_space<vmem>>, vector<1x128xf32>
    %79 = vector.broadcast %78 : vector<1x128xf32> to vector<8x128xf32>
    %80 = arith.addf %77, %79 : vector<8x128xf32>
    %cst_55 = arith.constant 0.000000e+00 : f32
    %81 = vector.broadcast %cst_55 : f32 to vector<8x128xf32>
    %82 = arith.maximumf %80, %81 : vector<8x128xf32>
    %83 = arith.truncf %82 : vector<8x128xf32> to vector<8x128xbf16>
    %c7 = arith.constant 7 : index
    %c0_56 = arith.constant 0 : index
    %c0_57 = arith.constant 0 : index
    %84 = vector.load %arg3[%c7, %c0_56, %c0_57] : memref<9x128x128xbf16, #tpu.memory_space<vmem>>, vector<1x128x128xbf16>
    %85 = vector.shape_cast %84 : vector<1x128x128xbf16> to vector<128x128xbf16>
    %cst_58 = arith.constant dense<0.000000e+00> : vector<8x128xf32>
    %86 = tpu.matmul %83, %85, %cst_58 {dimension_numbers = #tpu.dot_dimension_numbers<[1], [0], [0], [1], [0, 0, 1, 1], [], []>} : vector<8x128xbf16>, vector<128x128xbf16>, vector<8x128xf32> -> vector<8x128xf32>
    %c7_59 = arith.constant 7 : index
    %c0_60 = arith.constant 0 : index
    %87 = vector.load %arg4[%c7_59, %c0_60] : memref<9x128xf32, #tpu.memory_space<vmem>>, vector<1x128xf32>
    %88 = vector.broadcast %87 : vector<1x128xf32> to vector<8x128xf32>
    %89 = arith.addf %86, %88 : vector<8x128xf32>
    %cst_61 = arith.constant 0.000000e+00 : f32
    %90 = vector.broadcast %cst_61 : f32 to vector<8x128xf32>
    %91 = arith.maximumf %89, %90 : vector<8x128xf32>
    %92 = arith.truncf %91 : vector<8x128xf32> to vector<8x128xbf16>
    %c8 = arith.constant 8 : index
    %c0_62 = arith.constant 0 : index
    %c0_63 = arith.constant 0 : index
    %93 = vector.load %arg3[%c8, %c0_62, %c0_63] : memref<9x128x128xbf16, #tpu.memory_space<vmem>>, vector<1x128x128xbf16>
    %94 = vector.shape_cast %93 : vector<1x128x128xbf16> to vector<128x128xbf16>
    %cst_64 = arith.constant dense<0.000000e+00> : vector<8x128xf32>
    %95 = tpu.matmul %92, %94, %cst_64 {dimension_numbers = #tpu.dot_dimension_numbers<[1], [0], [0], [1], [0, 0, 1, 1], [], []>} : vector<8x128xbf16>, vector<128x128xbf16>, vector<8x128xf32> -> vector<8x128xf32>
    %c8_65 = arith.constant 8 : index
    %c0_66 = arith.constant 0 : index
    %96 = vector.load %arg4[%c8_65, %c0_66] : memref<9x128xf32, #tpu.memory_space<vmem>>, vector<1x128xf32>
    %97 = vector.broadcast %96 : vector<1x128xf32> to vector<8x128xf32>
    %98 = arith.addf %95, %97 : vector<8x128xf32>
    %c0_67 = arith.constant 0 : index
    %c0_68 = arith.constant 0 : index
    %99 = vector.load %arg5[%c0_67, %c0_68] : memref<8x128xf32, #tpu.memory_space<vmem>>, vector<8x128xf32>
    tpu.vector_store %arg5[%c0_67, %c0_68], %98 {strides = array<i32>} : memref<8x128xf32, #tpu.memory_space<vmem>>, vector<8x128xf32>,
    return
  }
}

</mosaic_0001>

<llo_original>
// kernel: tpu_custom_call.1
$region0: #{tpu_custom_call.1}
  #allocation0 [shape = 'u32[]', space=smem, size = 0x4, offset = 0x4, fixed_abs, tag = 'smem constant byte address 0x4 - core index']
  #allocation1 [shape = 'u32[144,128]{1,0:T(1,128)}', space=vmem, size = 0x12000, scoped, tag = 'internal scratch']
  %s0 = inlined_call_operand.vmem [shape: s32[16,1], index: 0, kind: input, shape index: {}]
  %s1 = inlined_call_operand.vmem [shape: bf16[16,16], index: 1, kind: input, shape index: {}]
  %s2 = inlined_call_operand.vmem [shape: bf16[16,128], index: 2, kind: input, shape index: {}]
  %s3 = inlined_call_operand.hbm [shape: bf16[9,128,128], index: 3, kind: input, shape index: {}]
  %s4 = inlined_call_operand.vmem [shape: f32[9,128], index: 4, kind: input, shape index: {}]
  %s5 = inlined_call_operand.hbm [shape: f32[8,128], index: 5, kind: output, shape index: {}]
  %s6 = sld [smem:[#allocation0]]
  $region41: #{tpu_custom_call.1} parent=0
    _
  %s8 = ssub.s32 1, %s6
  %s9 = scalar_select 0, %s8, %s6
  $region1: #{tpu_custom_call.1} parent=0
    #allocation2 [shape = 'u8[294912]{0}', space=vmem, size = 0x48000, scoped, tag = 'input window, operand 3, single buffered']
    #allocation3 [shape = 's32[1]{0}', space=sflag, size = 0x4, scoped, tag = 'scoped memory for tpu_custom_call.1']
    #allocation4 [shape = 's32[1]{0}', space=sflag, size = 0x4, scoped, tag = 'scoped memory for tpu_custom_call.1']
    #allocation5 [shape = 'u8[4096]{0}', space=vmem, size = 0x1000, scoped, tag = 'output window, operand 0, single buffered']
    %10 = vsyncpa [#allocation3], 0
    %11 = vsyncpa [#allocation4], 0
    // Predicated region
    $region2: #{tpu_custom_call.1} parent=1 // pred_check
      _
    $region3: #{tpu_custom_call.1} parent=1 // pred_check_branch
      %13 = sbr.rel (0) target = $region5
    $region4: #{tpu_custom_call.1} parent=1 // pred_region
      _
    $region5: #{tpu_custom_call.1} parent=1 // pred_fallthru
      _
    // Predicated region
    $region6: #{tpu_custom_call.1} parent=1 // pred_check
      _
    $region7: #{tpu_custom_call.1} parent=1 // pred_check_branch
      %15 = sbr.rel (0) target = $region9
    $region8: #{tpu_custom_call.1} parent=1 // pred_region
      _
    $region9: #{tpu_custom_call.1} parent=1 // pred_fallthru
      _
    // Predicated region
    $region10: #{tpu_custom_call.1} parent=1 // pred_check
      _
    $region11: #{tpu_custom_call.1} parent=1 // pred_check_branch
      %17 = sbr.rel (0) target = $region13
    $region12: #{tpu_custom_call.1} parent=1 // pred_region
      _
    $region13: #{tpu_custom_call.1} parent=1 // pred_fallthru
      _
    // Predicated region
    $region14: #{tpu_custom_call.1} parent=1 // pred_check
      _
    $region15: #{tpu_custom_call.1} parent=1 // pred_check_branch
      %19 = sbr.rel (0) target = $region17
    $region16: #{tpu_custom_call.1} parent=1 // pred_region
      %s21 = ssub.s32 9216, 9216
      %22 = vsyncadd [#allocation3], %s21
      %s23 = sshll.u32 [#allocation2], 4
      %s24 = int_to_ptr.vmem [resolvable:$true] %s23
      %29 = dma.hbm_to_vmem [thread:$0]  %s3, 9216, %s24, [#allocation3], 64, 64, 4
    $region17: #{tpu_custom_call.1} parent=1 // pred_fallthru
      _
    // Predicated region
    $region18: #{tpu_custom_call.1} parent=1 // pred_check
      _
    $region19: #{tpu_custom_call.1} parent=1 // pred_check_branch
      %31 = sbr.rel (0) target = $region21
    $region20: #{tpu_custom_call.1} parent=1 // pred_region
      _
    $region21: #{tpu_custom_call.1} parent=1 // pred_fallthru
      _
    // Predicated region
    $region22: #{tpu_custom_call.1} parent=1 // pred_check
      _
    $region23: #{tpu_custom_call.1} parent=1 // pred_check_branch
      %33 = sbr.rel (0) target = $region25
    $region24: #{tpu_custom_call.1} parent=1 // pred_region
      %34 = dma.done [#allocation3], 9216
    $region25: #{tpu_custom_call.1} parent=1 // pred_fallthru
      _
    %v36 = vld [vmem:[%s1] sm:$0xf]
    %v37 = vld [vmem:[%s1 + $0x4] sm:$0xf]
    %v38 = vld [vmem:[%s2] sm:$0xf]
    %v39 = vld [vmem:[%s2 + $0x4] sm:$0xf]
    %v40 = vld [vmem:[#allocation2] sm:$0xf]
    %v41 = vld [vmem:[#allocation2 + $0x4] sm:$0xf]
    %v42 = vld [vmem:[#allocation2 + $0x8] sm:$0xf]
    %v43 = vld [vmem:[#allocation2 + $0xc] sm:$0xf]
    %v44 = vld [vmem:[#allocation2 + $0x10] sm:$0xf]
    %v45 = vld [vmem:[#allocation2 + $0x14] sm:$0xf]
    %v46 = vld [vmem:[#allocation2 + $0x18] sm:$0xf]
    %v47 = vld [vmem:[#allocation2 + $0x1c] sm:$0xf]
    %v48 = vld [vmem:[#allocation2 + $0x20] sm:$0xf]
    %v49 = vld [vmem:[#allocation2 + $0x24] sm:$0xf]
    %v50 = vld [vmem:[#allocation2 + $0x28] sm:$0xf]
    %v51 = vld [vmem:[#allocation2 + $0x2c] sm:$0xf]
    %v52 = vld [vmem:[#allocation2 + $0x30] sm:$0xf]
    %v53 = vld [vmem:[#allocation2 + $0x34] sm:$0xf]
    %v54 = vld [vmem:[#allocation2 + $0x38] sm:$0xf]
    %v55 = vld [vmem:[#allocation2 + $0x3c] sm:$0xf]
    %v58 = vunpack.c.l.b16 %v38
    %v59 = vunpack.c.l.b16 %v39
    %v60 = vpack.c.b16 %v59, %v58
    %v78 = vunpack.c.l.b16 %v40
    %v79 = vunpack.c.l.b16 %v41
    %v80 = vunpack.c.l.b16 %v42
    %v81 = vunpack.c.l.b16 %v43
    %v82 = vunpack.c.l.b16 %v44
    %v83 = vunpack.c.l.b16 %v45
    %v84 = vunpack.c.l.b16 %v46
    %v85 = vunpack.c.l.b16 %v47
    %v86 = vunpack.c.l.b16 %v48
    %v87 = vunpack.c.l.b16 %v49
    %v88 = vunpack.c.l.b16 %v50
    %v89 = vunpack.c.l.b16 %v51
    %v90 = vunpack.c.l.b16 %v52
    %v91 = vunpack.c.l.b16 %v53
    %v92 = vunpack.c.l.b16 %v54
    %v93 = vunpack.c.l.b16 %v55
    %v94 = vpack.c.b16 %v79, %v78
    %v95 = vpack.c.b16 %v81, %v80
    %v96 = vpack.c.b16 %v83, %v82
    %v97 = vpack.c.b16 %v85, %v84
    %v98 = vpack.c.b16 %v87, %v86
    %v99 = vpack.c.b16 %v89, %v88
    %v100 = vpack.c.b16 %v91, %v90
    %v101 = vpack.c.b16 %v93, %v92
    %110 = vmatprep.subr.bf16.mxu0 0
    %111 = vmatpush1.bf16.msra.mxu0 %v94
    %112 = vmatprep.subr.bf16.mxu0 0
    %113 = vmatpush1.bf16.msra.mxu0 %v95
    %114 = vmatprep.subr.bf16.mxu0 0
    %115 = vmatpush1.bf16.msra.mxu0 %v96
    %116 = vmatprep.subr.bf16.mxu0 0
    %117 = vmatpush1.bf16.msra.mxu0 %v97
    %118 = vmatprep.subr.bf16.mxu0 0
    %119 = vmatpush1.bf16.msra.mxu0 %v98
    %120 = vmatprep.subr.bf16.mxu0 0
    %121 = vmatpush1.bf16.msra.mxu0 %v99
    %122 = vmatprep.subr.bf16.mxu0 0
    %123 = vmatpush1.bf16.msra.mxu0 %v100
    %124 = vmatprep.subr.bf16.mxu0 0
    %125 = vmatpush1.bf16.msra.mxu0 %v101
    %126 = vmatprep.subr.bf16.mxu0 0
    %127 = vmatpush1.bf16.msra.mxu0 0
    %128 = vmatprep.subr.bf16.mxu0 0
    %129 = vmatpush1.bf16.msra.mxu0 0
    %130 = vmatprep.subr.bf16.mxu0 0
    %131 = vmatpush1.bf16.msra.mxu0 0
    %132 = vmatprep.subr.bf16.mxu0 0
    %133 = vmatpush1.bf16.msra.mxu0 0
    %134 = vmatprep.subr.bf16.mxu0 0
    %135 = vmatpush1.bf16.msra.mxu0 0
    %136 = vmatprep.subr.bf16.mxu0 0
    %137 = vmatpush1.bf16.msra.mxu0 0
    %138 = vmatprep.subr.bf16.mxu0 0
    %139 = vmatpush1.bf16.msra.mxu0 0
    %140 = vmatprep.subr.bf16.mxu0 0
    %141 = vmatpush1.bf16.msra.mxu0 0
    %142 = vmatprep.mubr.bf16.mxu0 0
    %143 = vmatmul.mubr.bf16.gmra.mrb[0].mxu0 %v60
    %v144 = vpop.f32.mrb[0].mxu0
    %v145 = vadd.f32 0.0, %v144
    %v146 = vpop.f32.mrb[0].mxu0
    %v147 = vpop.f32.mrb[0].mxu0
    %v148 = vadd.f32 0.0, %v147
    %v149 = vpop.f32.mrb[0].mxu0
    %150 = vdwg.mxu0
    %v151 = vpack.c.bf16 %v148, %v145
    %v152 = vld [vmem:[%s4] sm:$0x1]
    %v153 = vlaneseq
    %v154 = vshrl.u32 %v153, 7
    %v155 = vsub.s32 0, %v154
    %v156 = vrot.slane %v152, %v155
    %v159 = vunpack.c.l.b16 %v36
    %v160 = vunpack.c.l.b16 %v37
    %v161 = vpack.c.b16 %v160, %v159
    %vm162 = vcmask 130048
    %v164 = vsel %vm162, %v161, 0
    %166 = vmatprep.subr.bf16.mxu0 0
    %167 = vmatpush1.bf16.msra.mxu0 %v151
    %168 = vmatprep.subr.bf16.mxu0 0
    %169 = vmatpush1.bf16.msra.mxu0 0
    %170 = vmatprep.subr.bf16.mxu0 0
    %171 = vmatpush1.bf16.msra.mxu0 0
    %172 = vmatprep.subr.bf16.mxu0 0
    %173 = vmatpush1.bf16.msra.mxu0 0
    %174 = vmatprep.subr.bf16.mxu0 0
    %175 = vmatpush1.bf16.msra.mxu0 0
    %176 = vmatprep.subr.bf16.mxu0 0
    %177 = vmatpush1.bf16.msra.mxu0 0
    %178 = vmatprep.subr.bf16.mxu0 0
    %179 = vmatpush1.bf16.msra.mxu0 0
    %180 = vmatprep.subr.bf16.mxu0 0
    %181 = vmatpush1.bf16.msra.mxu0 0
    %182 = vmatprep.subr.bf16.mxu0 0
    %183 = vmatpush1.bf16.msra.mxu0 0
    %184 = vmatprep.subr.bf16.mxu0 0
    %185 = vmatpush1.bf16.msra.mxu0 0
    %186 = vmatprep.subr.bf16.mxu0 0
    %187 = vmatpush1.bf16.msra.mxu0 0
    %188 = vmatprep.subr.bf16.mxu0 0
    %189 = vmatpush1.bf16.msra.mxu0 0
    %190 = vmatprep.subr.bf16.mxu0 0
    %191 = vmatpush1.bf16.msra.mxu0 0
    %192 = vmatprep.subr.bf16.mxu0 0
    %193 = vmatpush1.bf16.msra.mxu0 0
    %194 = vmatprep.subr.bf16.mxu0 0
    %195 = vmatpush1.bf16.msra.mxu0 0
    %196 = vmatprep.subr.bf16.mxu0 0
    %197 = vmatpush1.bf16.msra.mxu0 0
    %198 = vmatprep.mubr.bf16.mxu0 0
    %199 = vmatmul.mubr.bf16.gmra.mrb[0].mxu0 %v164
    %v200 = vpop.f32.mrb[0].mxu0
    %v201 = vadd.f32 %v156, %v200
    %v202 = vpop.f32.mrb[0].mxu0
    %v203 = vpop.f32.mrb[0].mxu0
    %v204 = vadd.f32 %v156, %v203
    %v205 = vpop.f32.mrb[0].mxu0
    %206 = vdwg.mxu0
    %v207 = vmax.f32 %v201, 0.0
    %v208 = vmax.f32 %v204, 0.0
    %v209 = vpack.c.bf16 %v208, %v207
    %s210 = scalar_lea.vmem [#allocation2], 64
    %v211 = vld [vmem:[%s210] sm:$0xf]
    %v212 = vld [vmem:[%s210 + $0x4] sm:$0xf]
    %v213 = vld [vmem:[%s210 + $0x8] sm:$0xf]
    %v214 = vld [vmem:[%s210 + $0xc] sm:$0xf]
    %v215 = vld [vmem:[%s210 + $0x10] sm:$0xf]
    %v216 = vld [vmem:[%s210 + $0x14] sm:$0xf]
    %v217 = vld [vmem:[%s210 + $0x18] sm:$0xf]
    %v218 = vld [vmem:[%s210 + $0x1c] sm:$0xf]
    %v219 = vld [vmem:[%s210 + $0x20] sm:$0xf]
    %v220 = vld [vmem:[%s210 + $0x24] sm:$0xf]
    %v221 = vld [vmem:[%s210 + $0x28] sm:$0xf]
    %v222 = vld [vmem:[%s210 + $0x2c] sm:$0xf]
    %v223 = vld [vmem:[%s210 + $0x30] sm:$0xf]
    %v224 = vld [vmem:[%s210 + $0x34] sm:$0xf]
    %v225 = vld [vmem:[%s210 + $0x38] sm:$0xf]
    %v226 = vld [vmem:[%s210 + $0x3c] sm:$0xf]
    %v243 = vunpack.c.l.b16 %v211
    %v244 = vunpack.c.l.b16 %v212
    %v245 = vunpack.c.l.b16 %v213
    %v246 = vunpack.c.l.b16 %v214
    %v247 = vunpack.c.l.b16 %v215
    %v248 = vunpack.c.l.b16 %v216
    %v249 = vunpack.c.l.b16 %v217
    %v250 = vunpack.c.l.b16 %v218
    %v251 = vunpack.c.l.b16 %v219
    %v252 = vunpack.c.l.b16 %v220
    %v253 = vunpack.c.l.b16 %v221
    %v254 = vunpack.c.l.b16 %v222
    %v255 = vunpack.c.l.b16 %v223
    %v256 = vunpack.c.l.b16 %v224
    %v257 = vunpack.c.l.b16 %v225
    %v258 = vunpack.c.l.b16 %v226
    %v259 = vpack.c.b16 %v244, %v243
    %v260 = vpack.c.b16 %v246, %v245
    %v261 = vpack.c.b16 %v248, %v247
    %v262 = vpack.c.b16 %v250, %v249
    %v263 = vpack.c.b16 %v252, %v251
    %v264 = vpack.c.b16 %v254, %v253
    %v265 = vpack.c.b16 %v256, %v255
    %v266 = vpack.c.b16 %v258, %v257
    %275 = vmatprep.subr.bf16.mxu0 0
    %276 = vmatpush1.bf16.msra.mxu0 %v259
    %277 = vmatprep.subr.bf16.mxu0 0
    %278 = vmatpush1.bf16.msra.mxu0 %v260
    %279 = vmatprep.subr.bf16.mxu0 0
    %280 = vmatpush1.bf16.msra.mxu0 %v261
    %281 = vmatprep.subr.bf16.mxu0 0
    %282 = vmatpush1.bf16.msra.mxu0 %v262
    %283 = vmatprep.subr.bf16.mxu0 0
    %284 = vmatpush1.bf16.msra.mxu0 %v263
    %285 = vmatprep.subr.bf16.mxu0 0
    %286 = vmatpush1.bf16.msra.mxu0 %v264
    %287 = vmatprep.subr.bf16.mxu0 0
    %288 = vmatpush1.bf16.msra.mxu0 %v265
    %289 = vmatprep.subr.bf16.mxu0 0
    %290 = vmatpush1.bf16.msra.mxu0 %v266
    %291 = vmatprep.subr.bf16.mxu0 0
    %292 = vmatpush1.bf16.msra.mxu0 0
    %293 = vmatprep.subr.bf16.mxu0 0
    %294 = vmatpush1.bf16.msra.mxu0 0
    %295 = vmatprep.subr.bf16.mxu0 0
    %296 = vmatpush1.bf16.msra.mxu0 0
    %297 = vmatprep.subr.bf16.mxu0 0
    %298 = vmatpush1.bf16.msra.mxu0 0
    %299 = vmatprep.subr.bf16.mxu0 0
    %300 = vmatpush1.bf16.msra.mxu0 0
    %301 = vmatprep.subr.bf16.mxu0 0
    %302 = vmatpush1.bf16.msra.mxu0 0
    %303 = vmatprep.subr.bf16.mxu0 0
    %304 = vmatpush1.bf16.msra.mxu0 0
    %305 = vmatprep.subr.bf16.mxu0 0
    %306 = vmatpush1.bf16.msra.mxu0 0
    %307 = vmatprep.mubr.bf16.mxu0 0
    %308 = vmatmul.mubr.bf16.gmra.mrb[0].mxu0 %v209
    %v309 = vpop.f32.mrb[0].mxu0
    %v310 = vadd.f32 0.0, %v309
    %v311 = vpop.f32.mrb[0].mxu0
    %v312 = vpop.f32.mrb[0].mxu0
    %v313 = vadd.f32 0.0, %v312
    %v314 = vpop.f32.mrb[0].mxu0
    %315 = vdwg.mxu0
    %v316 = vpack.c.bf16 %v313, %v310
    %v317 = vld [vmem:[%s4 + $0x1] sm:$0x1]
    %v318 = vlaneseq
    %v319 = vshrl.u32 %v318, 7
    %v320 = vsub.s32 0, %v319
    %v321 = vrot.slane %v317, %v320
    %322 = vmatprep.subr.bf16.mxu0 0
    %323 = vmatpush1.bf16.msra.mxu0 %v316
    %324 = vmatprep.subr.bf16.mxu0 0
    %325 = vmatpush1.bf16.msra.mxu0 0
    %326 = vmatprep.subr.bf16.mxu0 0
    %327 = vmatpush1.bf16.msra.mxu0 0
    %328 = vmatprep.subr.bf16.mxu0 0
    %329 = vmatpush1.bf16.msra.mxu0 0
    %330 = vmatprep.subr.bf16.mxu0 0
    %331 = vmatpush1.bf16.msra.mxu0 0
    %332 = vmatprep.subr.bf16.mxu0 0
    %333 = vmatpush1.bf16.msra.mxu0 0
    %334 = vmatprep.subr.bf16.mxu0 0
    %335 = vmatpush1.bf16.msra.mxu0 0
    %336 = vmatprep.subr.bf16.mxu0 0
    %337 = vmatpush1.bf16.msra.mxu0 0
    %338 = vmatprep.subr.bf16.mxu0 0
    %339 = vmatpush1.bf16.msra.mxu0 0
    %340 = vmatprep.subr.bf16.mxu0 0
    %341 = vmatpush1.bf16.msra.mxu0 0
    %342 = vmatprep.subr.bf16.mxu0 0
    %343 = vmatpush1.bf16.msra.mxu0 0
    %344 = vmatprep.subr.bf16.mxu0 0
    %345 = vmatpush1.bf16.msra.mxu0 0
    %346 = vmatprep.subr.bf16.mxu0 0
    %347 = vmatpush1.bf16.msra.mxu0 0
    %348 = vmatprep.subr.bf16.mxu0 0
    %349 = vmatpush1.bf16.msra.mxu0 0
    %350 = vmatprep.subr.bf16.mxu0 0
    %351 = vmatpush1.bf16.msra.mxu0 0
    %352 = vmatprep.subr.bf16.mxu0 0
    %353 = vmatpush1.bf16.msra.mxu0 0
    %354 = vmatprep.mubr.bf16.mxu0 0
    %355 = vmatmul.mubr.bf16.gmra.mrb[0].mxu0 %v164
    %v356 = vpop.f32.mrb[0].mxu0
    %v357 = vadd.f32 %v321, %v356
    %v358 = vpop.f32.mrb[0].mxu0
    %v359 = vpop.f32.mrb[0].mxu0
    %v360 = vadd.f32 %v321, %v359
    %v361 = vpop.f32.mrb[0].mxu0
    %362 = vdwg.mxu0
    %v363 = vpack.c.bf16 %v360, %v357
    %s364 = scalar_lea.vmem [#allocation2], 128
    %v365 = vld [vmem:[%s364] sm:$0xf]
    %v366 = vld [vmem:[%s364 + $0x4] sm:$0xf]
    %v367 = vld [vmem:[%s364 + $0x8] sm:$0xf]
    %v368 = vld [vmem:[%s364 + $0xc] sm:$0xf]
    %v369 = vld [vmem:[%s364 + $0x10] sm:$0xf]
    %v370 = vld [vmem:[%s364 + $0x14] sm:$0xf]
    %v371 = vld [vmem:[%s364 + $0x18] sm:$0xf]
    %v372 = vld [vmem:[%s364 + $0x1c] sm:$0xf]
    %v373 = vld [vmem:[%s364 + $0x20] sm:$0xf]
    %v374 = vld [vmem:[%s364 + $0x24] sm:$0xf]
    %v375 = vld [vmem:[%s364 + $0x28] sm:$0xf]
    %v376 = vld [vmem:[%s364 + $0x2c] sm:$0xf]
    %v377 = vld [vmem:[%s364 + $0x30] sm:$0xf]
    %v378 = vld [vmem:[%s364 + $0x34] sm:$0xf]
    %v379 = vld [vmem:[%s364 + $0x38] sm:$0xf]
    %v380 = vld [vmem:[%s364 + $0x3c] sm:$0xf]
    %v397 = vunpack.c.l.b16 %v365
    %v398 = vunpack.c.l.b16 %v366
    %v399 = vunpack.c.l.b16 %v367
    %v400 = vunpack.c.l.b16 %v368
    %v401 = vunpack.c.l.b16 %v369
    %v402 = vunpack.c.l.b16 %v370
    %v403 = vunpack.c.l.b16 %v371
    %v404 = vunpack.c.l.b16 %v372
    %v405 = vunpack.c.l.b16 %v373
    %v406 = vunpack.c.l.b16 %v374
    %v407 = vunpack.c.l.b16 %v375
    %v408 = vunpack.c.l.b16 %v376
    %v409 = vunpack.c.l.b16 %v377
    %v410 = vunpack.c.l.b16 %v378
    %v411 = vunpack.c.l.b16 %v379
    %v412 = vunpack.c.l.b16 %v380
    %v413 = vpack.c.b16 %v398, %v397
    %v414 = vpack.c.b16 %v400, %v399
    %v415 = vpack.c.b16 %v402, %v401
    %v416 = vpack.c.b16 %v404, %v403
    %v417 = vpack.c.b16 %v406, %v405
    %v418 = vpack.c.b16 %v408, %v407
    %v419 = vpack.c.b16 %v410, %v409
    %v420 = vpack.c.b16 %v412, %v411
    %429 = vmatprep.subr.bf16.mxu0 0
    %430 = vmatpush1.bf16.msra.mxu0 %v413
    %431 = vmatprep.subr.bf16.mxu0 0
    %432 = vmatpush1.bf16.msra.mxu0 %v414
    %433 = vmatprep.subr.bf16.mxu0 0
    %434 = vmatpush1.bf16.msra.mxu0 %v415
    %435 = vmatprep.subr.bf16.mxu0 0
    %436 = vmatpush1.bf16.msra.mxu0 %v416
    %437 = vmatprep.subr.bf16.mxu0 0
    %438 = vmatpush1.bf16.msra.mxu0 %v417
    %439 = vmatprep.subr.bf16.mxu0 0
    %440 = vmatpush1.bf16.msra.mxu0 %v418
    %441 = vmatprep.subr.bf16.mxu0 0
    %442 = vmatpush1.bf16.msra.mxu0 %v419
    %443 = vmatprep.subr.bf16.mxu0 0
    %444 = vmatpush1.bf16.msra.mxu0 %v420
    %445 = vmatprep.subr.bf16.mxu0 0
    %446 = vmatpush1.bf16.msra.mxu0 0
    %447 = vmatprep.subr.bf16.mxu0 0
    %448 = vmatpush1.bf16.msra.mxu0 0
    %449 = vmatprep.subr.bf16.mxu0 0
    %450 = vmatpush1.bf16.msra.mxu0 0
    %451 = vmatprep.subr.bf16.mxu0 0
    %452 = vmatpush1.bf16.msra.mxu0 0
    %453 = vmatprep.subr.bf16.mxu0 0
    %454 = vmatpush1.bf16.msra.mxu0 0
    %455 = vmatprep.subr.bf16.mxu0 0
    %456 = vmatpush1.bf16.msra.mxu0 0
    %457 = vmatprep.subr.bf16.mxu0 0
    %458 = vmatpush1.bf16.msra.mxu0 0
    %459 = vmatprep.subr.bf16.mxu0 0
    %460 = vmatpush1.bf16.msra.mxu0 0
    %461 = vmatprep.mubr.bf16.mxu0 0
    %462 = vmatmul.mubr.bf16.gmra.mrb[0].mxu0 %v363
    %v463 = vpop.f32.mrb[0].mxu0
    %v464 = vadd.f32 0.0, %v463
    %v465 = vpop.f32.mrb[0].mxu0
    %v466 = vpop.f32.mrb[0].mxu0
    %v467 = vadd.f32 0.0, %v466
    %v468 = vpop.f32.mrb[0].mxu0
    %469 = vdwg.mxu0
    %v470 = vpack.c.bf16 %v467, %v464
    %v471 = vld [vmem:[%s4 + $0x2] sm:$0x1]
    %v472 = vlaneseq
    %v473 = vshrl.u32 %v472, 7
    %v474 = vsub.s32 0, %v473
    %v475 = vrot.slane %v471, %v474
    %476 = vmatprep.subr.bf16.mxu0 0
    %477 = vmatpush1.bf16.msra.mxu0 %v470
    %478 = vmatprep.subr.bf16.mxu0 0
    %479 = vmatpush1.bf16.msra.mxu0 0
    %480 = vmatprep.subr.bf16.mxu0 0
    %481 = vmatpush1.bf16.msra.mxu0 0
    %482 = vmatprep.subr.bf16.mxu0 0
    %483 = vmatpush1.bf16.msra.mxu0 0
    %484 = vmatprep.subr.bf16.mxu0 0
    %485 = vmatpush1.bf16.msra.mxu0 0
    %486 = vmatprep.subr.bf16.mxu0 0
    %487 = vmatpush1.bf16.msra.mxu0 0
    %488 = vmatprep.subr.bf16.mxu0 0
    %489 = vmatpush1.bf16.msra.mxu0 0
    %490 = vmatprep.subr.bf16.mxu0 0
    %491 = vmatpush1.bf16.msra.mxu0 0
    %492 = vmatprep.subr.bf16.mxu0 0
    %493 = vmatpush1.bf16.msra.mxu0 0
    %494 = vmatprep.subr.bf16.mxu0 0
    %495 = vmatpush1.bf16.msra.mxu0 0
    %496 = vmatprep.subr.bf16.mxu0 0
    %497 = vmatpush1.bf16.msra.mxu0 0
    %498 = vmatprep.subr.bf16.mxu0 0
    %499 = vmatpush1.bf16.msra.mxu0 0
    %500 = vmatprep.subr.bf16.mxu0 0
    %501 = vmatpush1.bf16.msra.mxu0 0
    %502 = vmatprep.subr.bf16.mxu0 0
    %503 = vmatpush1.bf16.msra.mxu0 0
    %504 = vmatprep.subr.bf16.mxu0 0
    %505 = vmatpush1.bf16.msra.mxu0 0
    %506 = vmatprep.subr.bf16.mxu0 0
    %507 = vmatpush1.bf16.msra.mxu0 0
    %508 = vmatprep.mubr.bf16.mxu0 0
    %509 = vmatmul.mubr.bf16.gmra.mrb[0].mxu0 %v164
    %v510 = vpop.f32.mrb[0].mxu0
    %v511 = vadd.f32 %v475, %v510
    %v512 = vpop.f32.mrb[0].mxu0
    %v513 = vpop.f32.mrb[0].mxu0
    %v514 = vadd.f32 %v475, %v513
    %v515 = vpop.f32.mrb[0].mxu0
    %516 = vdwg.mxu0
    %v517 = vmax.f32 %v511, 0.0
    %v518 = vmax.f32 %v514, 0.0
    %v519 = vpack.c.bf16 %v518, %v517
    %s520 = scalar_lea.vmem [#allocation2], 192
    %v521 = vld [vmem:[%s520] sm:$0xf]
    %v522 = vld [vmem:[%s520 + $0x4] sm:$0xf]
    %v523 = vld [vmem:[%s520 + $0x8] sm:$0xf]
    %v524 = vld [vmem:[%s520 + $0xc] sm:$0xf]
    %v525 = vld [vmem:[%s520 + $0x10] sm:$0xf]
    %v526 = vld [vmem:[%s520 + $0x14] sm:$0xf]
    %v527 = vld [vmem:[%s520 + $0x18] sm:$0xf]
    %v528 = vld [vmem:[%s520 + $0x1c] sm:$0xf]
    %v529 = vld [vmem:[%s520 + $0x20] sm:$0xf]
    %v530 = vld [vmem:[%s520 + $0x24] sm:$0xf]
    %v531 = vld [vmem:[%s520 + $0x28] sm:$0xf]
    %v532 = vld [vmem:[%s520 + $0x2c] sm:$0xf]
    %v533 = vld [vmem:[%s520 + $0x30] sm:$0xf]
    %v534 = vld [vmem:[%s520 + $0x34] sm:$0xf]
    %v535 = vld [vmem:[%s520 + $0x38] sm:$0xf]
    %v536 = vld [vmem:[%s520 + $0x3c] sm:$0xf]
    %v553 = vunpack.c.l.b16 %v521
    %v554 = vunpack.c.l.b16 %v522
    %v555 = vunpack.c.l.b16 %v523
    %v556 = vunpack.c.l.b16 %v524
    %v557 = vunpack.c.l.b16 %v525
    %v558 = vunpack.c.l.b16 %v526
    %v559 = vunpack.c.l.b16 %v527
    %v560 = vunpack.c.l.b16 %v528
    %v561 = vunpack.c.l.b16 %v529
    %v562 = vunpack.c.l.b16 %v530
    %v563 = vunpack.c.l.b16 %v531
    %v564 = vunpack.c.l.b16 %v532
    %v565 = vunpack.c.l.b16 %v533
    %v566 = vunpack.c.l.b16 %v534
    %v567 = vunpack.c.l.b16 %v535
    %v568 = vunpack.c.l.b16 %v536
    %v569 = vpack.c.b16 %v554, %v553
    %v570 = vpack.c.b16 %v556, %v555
    %v571 = vpack.c.b16 %v558, %v557
    %v572 = vpack.c.b16 %v560, %v559
    %v573 = vpack.c.b16 %v562, %v561
    %v574 = vpack.c.b16 %v564, %v563
    %v575 = vpack.c.b16 %v566, %v565
    %v576 = vpack.c.b16 %v568, %v567
    %585 = vmatprep.subr.bf16.mxu0 0
    %586 = vmatpush1.bf16.msra.mxu0 %v569
    %587 = vmatprep.subr.bf16.mxu0 0
    %588 = vmatpush1.bf16.msra.mxu0 %v570
    %589 = vmatprep.subr.bf16.mxu0 0
    %590 = vmatpush1.bf16.msra.mxu0 %v571
    %591 = vmatprep.subr.bf16.mxu0 0
    %592 = vmatpush1.bf16.msra.mxu0 %v572
    %593 = vmatprep.subr.bf16.mxu0 0
    %594 = vmatpush1.bf16.msra.mxu0 %v573
    %595 = vmatprep.subr.bf16.mxu0 0
    %596 = vmatpush1.bf16.msra.mxu0 %v574
    %597 = vmatprep.subr.bf16.mxu0 0
    %598 = vmatpush1.bf16.msra.mxu0 %v575
    %599 = vmatprep.subr.bf16.mxu0 0
    %600 = vmatpush1.bf16.msra.mxu0 %v576
    %601 = vmatprep.subr.bf16.mxu0 0
    %602 = vmatpush1.bf16.msra.mxu0 0
    %603 = vmatprep.subr.bf16.mxu0 0
    %604 = vmatpush1.bf16.msra.mxu0 0
    %605 = vmatprep.subr.bf16.mxu0 0
    %606 = vmatpush1.bf16.msra.mxu0 0
    %607 = vmatprep.subr.bf16.mxu0 0
    %608 = vmatpush1.bf16.msra.mxu0 0
    %609 = vmatprep.subr.bf16.mxu0 0
    %610 = vmatpush1.bf16.msra.mxu0 0
    %611 = vmatprep.subr.bf16.mxu0 0
    %612 = vmatpush1.bf16.msra.mxu0 0
    %613 = vmatprep.subr.bf16.mxu0 0
    %614 = vmatpush1.bf16.msra.mxu0 0
    %615 = vmatprep.subr.bf16.mxu0 0
    %616 = vmatpush1.bf16.msra.mxu0 0
    %617 = vmatprep.mubr.bf16.mxu0 0
    %618 = vmatmul.mubr.bf16.gmra.mrb[0].mxu0 %v519
    %v619 = vpop.f32.mrb[0].mxu0
    %v620 = vadd.f32 0.0, %v619
    %v621 = vpop.f32.mrb[0].mxu0
    %v622 = vpop.f32.mrb[0].mxu0
    %v623 = vadd.f32 0.0, %v622
    %v624 = vpop.f32.mrb[0].mxu0
    %625 = vdwg.mxu0
    %v626 = vpack.c.bf16 %v623, %v620
    %v627 = vld [vmem:[%s4 + $0x3] sm:$0x1]
    %v628 = vlaneseq
    %v629 = vshrl.u32 %v628, 7
    %v630 = vsub.s32 0, %v629
    %v631 = vrot.slane %v627, %v630
    %632 = vmatprep.subr.bf16.mxu0 0
    %633 = vmatpush1.bf16.msra.mxu0 %v626
    %634 = vmatprep.subr.bf16.mxu0 0
    %635 = vmatpush1.bf16.msra.mxu0 0
    %636 = vmatprep.subr.bf16.mxu0 0
    %637 = vmatpush1.bf16.msra.mxu0 0
    %638 = vmatprep.subr.bf16.mxu0 0
    %639 = vmatpush1.bf16.msra.mxu0 0
    %640 = vmatprep.subr.bf16.mxu0 0
    %641 = vmatpush1.bf16.msra.mxu0 0
    %642 = vmatprep.subr.bf16.mxu0 0
    %643 = vmatpush1.bf16.msra.mxu0 0
    %644 = vmatprep.subr.bf16.mxu0 0
    %645 = vmatpush1.bf16.msra.mxu0 0
    %646 = vmatprep.subr.bf16.mxu0 0
    %647 = vmatpush1.bf16.msra.mxu0 0
    %648 = vmatprep.subr.bf16.mxu0 0
    %649 = vmatpush1.bf16.msra.mxu0 0
    %650 = vmatprep.subr.bf16.mxu0 0
    %651 = vmatpush1.bf16.msra.mxu0 0
    %652 = vmatprep.subr.bf16.mxu0 0
    %653 = vmatpush1.bf16.msra.mxu0 0
    %654 = vmatprep.subr.bf16.mxu0 0
    %655 = vmatpush1.bf16.msra.mxu0 0
    %656 = vmatprep.subr.bf16.mxu0 0
    %657 = vmatpush1.bf16.msra.mxu0 0
    %658 = vmatprep.subr.bf16.mxu0 0
    %659 = vmatpush1.bf16.msra.mxu0 0
    %660 = vmatprep.subr.bf16.mxu0 0
    %661 = vmatpush1.bf16.msra.mxu0 0
    %662 = vmatprep.subr.bf16.mxu0 0
    %663 = vmatpush1.bf16.msra.mxu0 0
    %664 = vmatprep.mubr.bf16.mxu0 0
    %665 = vmatmul.mubr.bf16.gmra.mrb[0].mxu0 %v164
    %v666 = vpop.f32.mrb[0].mxu0
    %v667 = vadd.f32 %v631, %v666
    %v668 = vpop.f32.mrb[0].mxu0
    %v669 = vpop.f32.mrb[0].mxu0
    %v670 = vadd.f32 %v631, %v669
    %v671 = vpop.f32.mrb[0].mxu0
    %672 = vdwg.mxu0
    %v673 = vmax.f32 %v667, 0.0
    %v674 = vmax.f32 %v670, 0.0
    %v675 = vpack.c.bf16 %v674, %v673
    %s676 = scalar_lea.vmem [#allocation2], 256
    %v677 = vld [vmem:[%s676] sm:$0xf]
    %v678 = vld [vmem:[%s676 + $0x4] sm:$0xf]
    %v679 = vld [vmem:[%s676 + $0x8] sm:$0xf]
    %v680 = vld [vmem:[%s676 + $0xc] sm:$0xf]
    %v681 = vld [vmem:[%s676 + $0x10] sm:$0xf]
    %v682 = vld [vmem:[%s676 + $0x14] sm:$0xf]
    %v683 = vld [vmem:[%s676 + $0x18] sm:$0xf]
    %v684 = vld [vmem:[%s676 + $0x1c] sm:$0xf]
    %v685 = vld [vmem:[%s676 + $0x20] sm:$0xf]
    %v686 = vld [vmem:[%s676 + $0x24] sm:$0xf]
    %v687 = vld [vmem:[%s676 + $0x28] sm:$0xf]
    %v688 = vld [vmem:[%s676 + $0x2c] sm:$0xf]
    %v689 = vld [vmem:[%s676 + $0x30] sm:$0xf]
    %v690 = vld [vmem:[%s676 + $0x34] sm:$0xf]
    %v691 = vld [vmem:[%s676 + $0x38] sm:$0xf]
    %v692 = vld [vmem:[%s676 + $0x3c] sm:$0xf]
    %v709 = vunpack.c.l.b16 %v677
    %v710 = vunpack.c.l.b16 %v678
    %v711 = vunpack.c.l.b16 %v679
    %v712 = vunpack.c.l.b16 %v680
    %v713 = vunpack.c.l.b16 %v681
    %v714 = vunpack.c.l.b16 %v682
    %v715 = vunpack.c.l.b16 %v683
    %v716 = vunpack.c.l.b16 %v684
    %v717 = vunpack.c.l.b16 %v685
    %v718 = vunpack.c.l.b16 %v686
    %v719 = vunpack.c.l.b16 %v687
    %v720 = vunpack.c.l.b16 %v688
    %v721 = vunpack.c.l.b16 %v689
    %v722 = vunpack.c.l.b16 %v690
    %v723 = vunpack.c.l.b16 %v691
    %v724 = vunpack.c.l.b16 %v692
    %v725 = vpack.c.b16 %v710, %v709
    %v726 = vpack.c.b16 %v712, %v711
    %v727 = vpack.c.b16 %v714, %v713
    %v728 = vpack.c.b16 %v716, %v715
    %v729 = vpack.c.b16 %v718, %v717
    %v730 = vpack.c.b16 %v720, %v719
    %v731 = vpack.c.b16 %v722, %v721
    %v732 = vpack.c.b16 %v724, %v723
    %741 = vmatprep.subr.bf16.mxu0 0
    %742 = vmatpush1.bf16.msra.mxu0 %v725
    %743 = vmatprep.subr.bf16.mxu0 0
    %744 = vmatpush1.bf16.msra.mxu0 %v726
    %745 = vmatprep.subr.bf16.mxu0 0
    %746 = vmatpush1.bf16.msra.mxu0 %v727
    %747 = vmatprep.subr.bf16.mxu0 0
    %748 = vmatpush1.bf16.msra.mxu0 %v728
    %749 = vmatprep.subr.bf16.mxu0 0
    %750 = vmatpush1.bf16.msra.mxu0 %v729
    %751 = vmatprep.subr.bf16.mxu0 0
    %752 = vmatpush1.bf16.msra.mxu0 %v730
    %753 = vmatprep.subr.bf16.mxu0 0
    %754 = vmatpush1.bf16.msra.mxu0 %v731
    %755 = vmatprep.subr.bf16.mxu0 0
    %756 = vmatpush1.bf16.msra.mxu0 %v732
    %757 = vmatprep.subr.bf16.mxu0 0
    %758 = vmatpush1.bf16.msra.mxu0 0
    %759 = vmatprep.subr.bf16.mxu0 0
    %760 = vmatpush1.bf16.msra.mxu0 0
    %761 = vmatprep.subr.bf16.mxu0 0
    %762 = vmatpush1.bf16.msra.mxu0 0
    %763 = vmatprep.subr.bf16.mxu0 0
    %764 = vmatpush1.bf16.msra.mxu0 0
    %765 = vmatprep.subr.bf16.mxu0 0
    %766 = vmatpush1.bf16.msra.mxu0 0
    %767 = vmatprep.subr.bf16.mxu0 0
    %768 = vmatpush1.bf16.msra.mxu0 0
    %769 = vmatprep.subr.bf16.mxu0 0
    %770 = vmatpush1.bf16.msra.mxu0 0
    %771 = vmatprep.subr.bf16.mxu0 0
    %772 = vmatpush1.bf16.msra.mxu0 0
    %773 = vmatprep.mubr.bf16.mxu0 0
    %774 = vmatmul.mubr.bf16.gmra.mrb[0].mxu0 %v675
    %v775 = vpop.f32.mrb[0].mxu0
    %v776 = vadd.f32 0.0, %v775
    %v777 = vpop.f32.mrb[0].mxu0
    %v778 = vpop.f32.mrb[0].mxu0
    %v779 = vadd.f32 0.0, %v778
    %v780 = vpop.f32.mrb[0].mxu0
    %781 = vdwg.mxu0
    %v782 = vpack.c.bf16 %v779, %v776
    %v783 = vld [vmem:[%s4 + $0x4] sm:$0x1]
    %v784 = vlaneseq
    %v785 = vshrl.u32 %v784, 7
    %v786 = vsub.s32 0, %v785
    %v787 = vrot.slane %v783, %v786
    %788 = vmatprep.subr.bf16.mxu0 0
    %789 = vmatpush1.bf16.msra.mxu0 %v782
    %790 = vmatprep.subr.bf16.mxu0 0
    %791 = vmatpush1.bf16.msra.mxu0 0
    %792 = vmatprep.subr.bf16.mxu0 0
    %793 = vmatpush1.bf16.msra.mxu0 0
    %794 = vmatprep.subr.bf16.mxu0 0
    %795 = vmatpush1.bf16.msra.mxu0 0
    %796 = vmatprep.subr.bf16.mxu0 0
    %797 = vmatpush1.bf16.msra.mxu0 0
    %798 = vmatprep.subr.bf16.mxu0 0
    %799 = vmatpush1.bf16.msra.mxu0 0
    %800 = vmatprep.subr.bf16.mxu0 0
    %801 = vmatpush1.bf16.msra.mxu0 0
    %802 = vmatprep.subr.bf16.mxu0 0
    %803 = vmatpush1.bf16.msra.mxu0 0
    %804 = vmatprep.subr.bf16.mxu0 0
    %805 = vmatpush1.bf16.msra.mxu0 0
    %806 = vmatprep.subr.bf16.mxu0 0
    %807 = vmatpush1.bf16.msra.mxu0 0
    %808 = vmatprep.subr.bf16.mxu0 0
    %809 = vmatpush1.bf16.msra.mxu0 0
    %810 = vmatprep.subr.bf16.mxu0 0
    %811 = vmatpush1.bf16.msra.mxu0 0
    %812 = vmatprep.subr.bf16.mxu0 0
    %813 = vmatpush1.bf16.msra.mxu0 0
    %814 = vmatprep.subr.bf16.mxu0 0
    %815 = vmatpush1.bf16.msra.mxu0 0
    %816 = vmatprep.subr.bf16.mxu0 0
    %817 = vmatpush1.bf16.msra.mxu0 0
    %818 = vmatprep.subr.bf16.mxu0 0
    %819 = vmatpush1.bf16.msra.mxu0 0
    %820 = vmatprep.mubr.bf16.mxu0 0
    %821 = vmatmul.mubr.bf16.gmra.mrb[0].mxu0 %v164
    %v822 = vpop.f32.mrb[0].mxu0
    %v823 = vadd.f32 %v787, %v822
    %v824 = vpop.f32.mrb[0].mxu0
    %v825 = vpop.f32.mrb[0].mxu0
    %v826 = vadd.f32 %v787, %v825
    %v827 = vpop.f32.mrb[0].mxu0
    %828 = vdwg.mxu0
    %v829 = vmax.f32 %v823, 0.0
    %v830 = vmax.f32 %v826, 0.0
    %v831 = vpack.c.bf16 %v830, %v829
    %832 = vmatprep.subr.bf16.mxu0 0
    %833 = vmatpush1.bf16.msra.mxu0 %v831
    %834 = vmatprep.subr.bf16.mxu0 0
    %835 = vmatpush1.bf16.msra.mxu0 0
    %836 = vmatprep.subr.bf16.mxu0 0
    %837 = vmatpush1.bf16.msra.mxu0 0
    %838 = vmatprep.subr.bf16.mxu0 0
    %839 = vmatpush1.bf16.msra.mxu0 0
    %840 = vmatprep.subr.bf16.mxu0 0
    %841 = vmatpush1.bf16.msra.mxu0 0
    %842 = vmatprep.subr.bf16.mxu0 0
    %843 = vmatpush1.bf16.msra.mxu0 0
    %844 = vmatprep.subr.bf16.mxu0 0
    %845 = vmatpush1.bf16.msra.mxu0 0
    %846 = vmatprep.subr.bf16.mxu0 0
    %847 = vmatpush1.bf16.msra.mxu0 0
    %848 = vmatprep.subr.bf16.mxu0 0
    %849 = vmatpush1.bf16.msra.mxu0 0
    %850 = vmatprep.subr.bf16.mxu0 0
    %851 = vmatpush1.bf16.msra.mxu0 0
    %852 = vmatprep.subr.bf16.mxu0 0
    %853 = vmatpush1.bf16.msra.mxu0 0
    %854 = vmatprep.subr.bf16.mxu0 0
    %855 = vmatpush1.bf16.msra.mxu0 0
    %856 = vmatprep.subr.bf16.mxu0 0
    %857 = vmatpush1.bf16.msra.mxu0 0
    %858 = vmatprep.subr.bf16.mxu0 0
    %859 = vmatpush1.bf16.msra.mxu0 0
    %860 = vmatprep.subr.bf16.mxu0 0
    %861 = vmatpush1.bf16.msra.mxu0 0
    %862 = vmatprep.subr.bf16.mxu0 0
    %863 = vmatpush1.bf16.msra.mxu0 0
    %864 = vmatprep.mubr.bf16.mxu0 0
    %865 = vmatmul.mubr.bf16.gmra.mrb[0].mxu0 %v164
    %v866 = vpop.f32.mrb[0].mxu0
    %v867 = vadd.f32 0.0, %v866
    %v868 = vpop.f32.mrb[0].mxu0
    %v869 = vpop.f32.mrb[0].mxu0
    %v870 = vadd.f32 0.0, %v869
    %v871 = vpop.f32.mrb[0].mxu0
    %872 = vdwg.mxu0
    %v873 = vpack.c.bf16 %v870, %v867
    %874 = vmatprep.subr.bf16.mxu0 0
    %875 = vmatpush1.bf16.msra.mxu0 %v873
    %876 = vmatprep.subr.bf16.mxu0 0
    %877 = vmatpush1.bf16.msra.mxu0 0
    %878 = vmatprep.subr.bf16.mxu0 0
    %879 = vmatpush1.bf16.msra.mxu0 0
    %880 = vmatprep.subr.bf16.mxu0 0
    %881 = vmatpush1.bf16.msra.mxu0 0
    %882 = vmatprep.subr.bf16.mxu0 0
    %883 = vmatpush1.bf16.msra.mxu0 0
    %884 = vmatprep.subr.bf16.mxu0 0
    %885 = vmatpush1.bf16.msra.mxu0 0
    %886 = vmatprep.subr.bf16.mxu0 0
    %887 = vmatpush1.bf16.msra.mxu0 0
    %888 = vmatprep.subr.bf16.mxu0 0
    %889 = vmatpush1.bf16.msra.mxu0 0
    %890 = vmatprep.subr.bf16.mxu0 0
    %891 = vmatpush1.bf16.msra.mxu0 0
    %892 = vmatprep.subr.bf16.mxu0 0
    %893 = vmatpush1.bf16.msra.mxu0 0
    %894 = vmatprep.subr.bf16.mxu0 0
    %895 = vmatpush1.bf16.msra.mxu0 0
    %896 = vmatprep.subr.bf16.mxu0 0
    %897 = vmatpush1.bf16.msra.mxu0 0
    %898 = vmatprep.subr.bf16.mxu0 0
    %899 = vmatpush1.bf16.msra.mxu0 0
    %900 = vmatprep.subr.bf16.mxu0 0
    %901 = vmatpush1.bf16.msra.mxu0 0
    %902 = vmatprep.subr.bf16.mxu0 0
    %903 = vmatpush1.bf16.msra.mxu0 0
    %904 = vmatprep.subr.bf16.mxu0 0
    %905 = vmatpush1.bf16.msra.mxu0 0
    %906 = vmatprep.mubr.bf16.mxu0 0
    %907 = vmatmul.mubr.bf16.gmra.mrb[0].mxu0 %v164
    %v908 = vpop.f32.mrb[0].mxu0
    %v909 = vadd.f32 0.0, %v908
    %v910 = vpop.f32.mrb[0].mxu0
    %v911 = vpop.f32.mrb[0].mxu0
    %v912 = vadd.f32 0.0, %v911
    %v913 = vpop.f32.mrb[0].mxu0
    %914 = vdwg.mxu0
    %v915 = vpack.c.bf16 %v912, %v909
    %916 = vmatprep.subr.bf16.mxu0 0
    %917 = vmatpush1.bf16.msra.mxu0 %v915
    %918 = vmatprep.subr.bf16.mxu0 0
    %919 = vmatpush1.bf16.msra.mxu0 0
    %920 = vmatprep.subr.bf16.mxu0 0
    %921 = vmatpush1.bf16.msra.mxu0 0
    %922 = vmatprep.subr.bf16.mxu0 0
    %923 = vmatpush1.bf16.msra.mxu0 0
    %924 = vmatprep.subr.bf16.mxu0 0
    %925 = vmatpush1.bf16.msra.mxu0 0
    %926 = vmatprep.subr.bf16.mxu0 0
    %927 = vmatpush1.bf16.msra.mxu0 0
    %928 = vmatprep.subr.bf16.mxu0 0
    %929 = vmatpush1.bf16.msra.mxu0 0
    %930 = vmatprep.subr.bf16.mxu0 0
    %931 = vmatpush1.bf16.msra.mxu0 0
    %932 = vmatprep.subr.bf16.mxu0 0
    %933 = vmatpush1.bf16.msra.mxu0 0
    %934 = vmatprep.subr.bf16.mxu0 0
    %935 = vmatpush1.bf16.msra.mxu0 0
    %936 = vmatprep.subr.bf16.mxu0 0
    %937 = vmatpush1.bf16.msra.mxu0 0
    %938 = vmatprep.subr.bf16.mxu0 0
    %939 = vmatpush1.bf16.msra.mxu0 0
    %940 = vmatprep.subr.bf16.mxu0 0
    %941 = vmatpush1.bf16.msra.mxu0 0
    %942 = vmatprep.subr.bf16.mxu0 0
    %943 = vmatpush1.bf16.msra.mxu0 0
    %944 = vmatprep.subr.bf16.mxu0 0
    %945 = vmatpush1.bf16.msra.mxu0 0
    %946 = vmatprep.subr.bf16.mxu0 0
    %947 = vmatpush1.bf16.msra.mxu0 0
    %948 = vmatprep.mubr.bf16.mxu0 0
    %949 = vmatmul.mubr.bf16.gmra.mrb[0].mxu0 %v164
    %v950 = vpop.f32.mrb[0].mxu0
    %v951 = vadd.f32 0.0, %v950
    %v952 = vpop.f32.mrb[0].mxu0
    %v953 = vpop.f32.mrb[0].mxu0
    %v954 = vadd.f32 0.0, %v953
    %v955 = vpop.f32.mrb[0].mxu0
    %956 = vdwg.mxu0
    %v957 = vpack.c.bf16 %v954, %v951
    %958 = vmatprep.subr.bf16.mxu0 0
    %959 = vmatpush1.bf16.msra.mxu0 %v957
    %960 = vmatprep.subr.bf16.mxu0 0
    %961 = vmatpush1.bf16.msra.mxu0 0
    %962 = vmatprep.subr.bf16.mxu0 0
    %963 = vmatpush1.bf16.msra.mxu0 0
    %964 = vmatprep.subr.bf16.mxu0 0
    %965 = vmatpush1.bf16.msra.mxu0 0
    %966 = vmatprep.subr.bf16.mxu0 0
    %967 = vmatpush1.bf16.msra.mxu0 0
    %968 = vmatprep.subr.bf16.mxu0 0
    %969 = vmatpush1.bf16.msra.mxu0 0
    %970 = vmatprep.subr.bf16.mxu0 0
    %971 = vmatpush1.bf16.msra.mxu0 0
    %972 = vmatprep.subr.bf16.mxu0 0
    %973 = vmatpush1.bf16.msra.mxu0 0
    %974 = vmatprep.subr.bf16.mxu0 0
    %975 = vmatpush1.bf16.msra.mxu0 0
    %976 = vmatprep.subr.bf16.mxu0 0
    %977 = vmatpush1.bf16.msra.mxu0 0
    %978 = vmatprep.subr.bf16.mxu0 0
    %979 = vmatpush1.bf16.msra.mxu0 0
    %980 = vmatprep.subr.bf16.mxu0 0
    %981 = vmatpush1.bf16.msra.mxu0 0
    %982 = vmatprep.subr.bf16.mxu0 0
    %983 = vmatpush1.bf16.msra.mxu0 0
    %984 = vmatprep.subr.bf16.mxu0 0
    %985 = vmatpush1.bf16.msra.mxu0 0
    %986 = vmatprep.subr.bf16.mxu0 0
    %987 = vmatpush1.bf16.msra.mxu0 0
    %988 = vmatprep.subr.bf16.mxu0 0
    %989 = vmatpush1.bf16.msra.mxu0 0
    %990 = vmatprep.mubr.bf16.mxu0 0
    %991 = vmatmul.mubr.bf16.gmra.mrb[0].mxu0 %v164
    %v992 = vpop.f32.mrb[0].mxu0
    %v993 = vadd.f32 0.0, %v992
    %v994 = vpop.f32.mrb[0].mxu0
    %v995 = vpop.f32.mrb[0].mxu0
    %v996 = vadd.f32 0.0, %v995
    %v997 = vpop.f32.mrb[0].mxu0
    %998 = vdwg.mxu0
    %v999 = vpack.c.bf16 %v996, %v993
    %s1000 = scalar_lea.vmem [#allocation2], 320
    %v1001 = vld [vmem:[%s1000] sm:$0xf]
    %v1002 = vld [vmem:[%s1000 + $0x4] sm:$0xf]
    %v1003 = vld [vmem:[%s1000 + $0x8] sm:$0xf]
    %v1004 = vld [vmem:[%s1000 + $0xc] sm:$0xf]
    %v1005 = vld [vmem:[%s1000 + $0x10] sm:$0xf]
    %v1006 = vld [vmem:[%s1000 + $0x14] sm:$0xf]
    %v1007 = vld [vmem:[%s1000 + $0x18] sm:$0xf]
    %v1008 = vld [vmem:[%s1000 + $0x1c] sm:$0xf]
    %v1009 = vld [vmem:[%s1000 + $0x20] sm:$0xf]
    %v1010 = vld [vmem:[%s1000 + $0x24] sm:$0xf]
    %v1011 = vld [vmem:[%s1000 + $0x28] sm:$0xf]
    %v1012 = vld [vmem:[%s1000 + $0x2c] sm:$0xf]
    %v1013 = vld [vmem:[%s1000 + $0x30] sm:$0xf]
    %v1014 = vld [vmem:[%s1000 + $0x34] sm:$0xf]
    %v1015 = vld [vmem:[%s1000 + $0x38] sm:$0xf]
    %v1016 = vld [vmem:[%s1000 + $0x3c] sm:$0xf]
    %v1017 = vld [vmem:[%s4 + $0x5] sm:$0x1]
    %v1018 = vlaneseq
    %v1019 = vshrl.u32 %v1018, 7
    %v1020 = vsub.s32 0, %v1019
    %v1021 = vrot.slane %v1017, %v1020
    %v1038 = vunpack.c.l.b16 %v1001
    %v1039 = vunpack.c.l.b16 %v1002
    %v1040 = vunpack.c.l.b16 %v1003
    %v1041 = vunpack.c.l.b16 %v1004
    %v1042 = vunpack.c.l.b16 %v1005
    %v1043 = vunpack.c.l.b16 %v1006
    %v1044 = vunpack.c.l.b16 %v1007
    %v1045 = vunpack.c.l.b16 %v1008
    %v1046 = vunpack.c.l.b16 %v1009
    %v1047 = vunpack.c.l.b16 %v1010
    %v1048 = vunpack.c.l.b16 %v1011
    %v1049 = vunpack.c.l.b16 %v1012
    %v1050 = vunpack.c.l.b16 %v1013
    %v1051 = vunpack.c.l.b16 %v1014
    %v1052 = vunpack.c.l.b16 %v1015
    %v1053 = vunpack.c.l.b16 %v1016
    %v1054 = vpack.c.b16 %v1039, %v1038
    %v1055 = vpack.c.b16 %v1041, %v1040
    %v1056 = vpack.c.b16 %v1043, %v1042
    %v1057 = vpack.c.b16 %v1045, %v1044
    %v1058 = vpack.c.b16 %v1047, %v1046
    %v1059 = vpack.c.b16 %v1049, %v1048
    %v1060 = vpack.c.b16 %v1051, %v1050
    %v1061 = vpack.c.b16 %v1053, %v1052
    %1070 = vmatprep.subr.bf16.mxu0 0
    %1071 = vmatpush1.bf16.msra.mxu0 %v1054
    %1072 = vmatprep.subr.bf16.mxu0 0
    %1073 = vmatpush1.bf16.msra.mxu0 %v1055
    %1074 = vmatprep.subr.bf16.mxu0 0
    %1075 = vmatpush1.bf16.msra.mxu0 %v1056
    %1076 = vmatprep.subr.bf16.mxu0 0
    %1077 = vmatpush1.bf16.msra.mxu0 %v1057
    %1078 = vmatprep.subr.bf16.mxu0 0
    %1079 = vmatpush1.bf16.msra.mxu0 %v1058
    %1080 = vmatprep.subr.bf16.mxu0 0
    %1081 = vmatpush1.bf16.msra.mxu0 %v1059
    %1082 = vmatprep.subr.bf16.mxu0 0
    %1083 = vmatpush1.bf16.msra.mxu0 %v1060
    %1084 = vmatprep.subr.bf16.mxu0 0
    %1085 = vmatpush1.bf16.msra.mxu0 %v1061
    %1086 = vmatprep.subr.bf16.mxu0 0
    %1087 = vmatpush1.bf16.msra.mxu0 0
    %1088 = vmatprep.subr.bf16.mxu0 0
    %1089 = vmatpush1.bf16.msra.mxu0 0
    %1090 = vmatprep.subr.bf16.mxu0 0
    %1091 = vmatpush1.bf16.msra.mxu0 0
    %1092 = vmatprep.subr.bf16.mxu0 0
    %1093 = vmatpush1.bf16.msra.mxu0 0
    %1094 = vmatprep.subr.bf16.mxu0 0
    %1095 = vmatpush1.bf16.msra.mxu0 0
    %1096 = vmatprep.subr.bf16.mxu0 0
    %1097 = vmatpush1.bf16.msra.mxu0 0
    %1098 = vmatprep.subr.bf16.mxu0 0
    %1099 = vmatpush1.bf16.msra.mxu0 0
    %1100 = vmatprep.subr.bf16.mxu0 0
    %1101 = vmatpush1.bf16.msra.mxu0 0
    %1102 = vmatprep.mubr.bf16.mxu0 0
    %1103 = vmatmul.mubr.bf16.gmra.mrb[0].mxu0 %v999
    %v1104 = vpop.f32.mrb[0].mxu0
    %v1105 = vadd.f32 %v1021, %v1104
    %v1106 = vpop.f32.mrb[0].mxu0
    %v1107 = vpop.f32.mrb[0].mxu0
    %v1108 = vadd.f32 %v1021, %v1107
    %v1109 = vpop.f32.mrb[0].mxu0
    %1110 = vdwg.mxu0
    %v1111 = vld [vmem:[%s0] sm:$0xff]
    %v1112 = vld [vmem:[%s0 + $0x8] sm:$0xff]
    %v1113 = vlaneseq
    %v1114 = vshrl.u32 %v1113, 7
    loop: start=0, step=1, limit=2
    $region26: #{tpu_custom_call.1} parent=1 // loop_pre_header
      _
    $region27: #{tpu_custom_call.1} parent=1 // loop_header
      %s1116 = sphi 0, %s1120
      %p1117 = scmp.ge.s32.totalorder %s1116, 2
      %v1121 = vphi 0.0, %v1147
    $region28: #{tpu_custom_call.1} parent=1 // loop_header_branch
      %1119 = sbr.rel (%p1117) target = $region32
    $region29: #{tpu_custom_call.1} parent=1 // loop_body
      %v1122 = vstv %s1116
      %vm1123 = vcmp.eq.s32.totalorder %v1111, %v1122
      %vm1124 = vcmp.eq.s32.totalorder %v1112, %v1122
      %v1125 = vsel %vm1123, 1, 0
      %v1126 = vsel %vm1124, 1, 0
      %1127 = vset.pattern.permute.xlu0 0
      %1128 = vperm.xlu0 %1127, %v1125
      %v1129 = vpop.permute.xlu0 %1128
      %1130 = vset.pattern.permute.xlu0 0
      %1131 = vperm.xlu0 %1130, %v1126
      %v1132 = vpop.permute.xlu0 %1131
      %vm1133 = vcmp.eq.s32.totalorder %v1129, 1
      %vm1134 = vcmp.eq.s32.totalorder %v1132, 1
      %v1135 = vsel %vm1133, %v1105, -3.4028235e+38
      %v1136 = vsel %vm1134, %v1108, -3.4028235e+38
      %v1137 = vmax.f32 %v1135, %v1136
      %v1138 = vrot.slane %v1137, 4
      %v1139 = vmax.f32 %v1137, %v1138
      %v1140 = vrot.slane %v1139, 2
      %v1141 = vmax.f32 %v1139, %v1140
      %v1142 = vrot.slane %v1141, 1
      %v1143 = vmax.f32 %v1141, %v1142
      %vm1144 = vcmp.eq.s32.totalorder %v1114, %v1122
      %v1145 = vsel %vm1144, 1, 0
      %vm1146 = vcmp.eq.s32.totalorder %v1145, 1
      %v1147 = vsel %vm1146, %v1143, %v1121
    $region30: #{tpu_custom_call.1} parent=1 // loop_footer
      %s1120 = sadd.s32 1, %s1116
    $region31: #{tpu_custom_call.1} parent=1 // loop_footer_branch
      %1115 = sbr.rel target = $region27
    $region32: #{tpu_custom_call.1} parent=1 // loop_exit
      _
    %v1148 = vpack.c.bf16 %v1121, %v1121
    %s1149 = scalar_lea.vmem [#allocation2], 384
    %v1150 = vld [vmem:[%s1149] sm:$0xf]
    %v1151 = vld [vmem:[%s1149 + $0x4] sm:$0xf]
    %v1152 = vld [vmem:[%s1149 + $0x8] sm:$0xf]
    %v1153 = vld [vmem:[%s1149 + $0xc] sm:$0xf]
    %v1154 = vld [vmem:[%s1149 + $0x10] sm:$0xf]
    %v1155 = vld [vmem:[%s1149 + $0x14] sm:$0xf]
    %v1156 = vld [vmem:[%s1149 + $0x18] sm:$0xf]
    %v1157 = vld [vmem:[%s1149 + $0x1c] sm:$0xf]
    %v1158 = vld [vmem:[%s1149 + $0x20] sm:$0xf]
    %v1159 = vld [vmem:[%s1149 + $0x24] sm:$0xf]
    %v1160 = vld [vmem:[%s1149 + $0x28] sm:$0xf]
    %v1161 = vld [vmem:[%s1149 + $0x2c] sm:$0xf]
    %v1162 = vld [vmem:[%s1149 + $0x30] sm:$0xf]
    %v1163 = vld [vmem:[%s1149 + $0x34] sm:$0xf]
    %v1164 = vld [vmem:[%s1149 + $0x38] sm:$0xf]
    %v1165 = vld [vmem:[%s1149 + $0x3c] sm:$0xf]
    %v1166 = vld [vmem:[%s4 + $0x6] sm:$0x1]
    %v1167 = vlaneseq
    %v1168 = vshrl.u32 %v1167, 7
    %v1169 = vsub.s32 0, %v1168
    %v1170 = vrot.slane %v1166, %v1169
    %v1187 = vunpack.c.l.b16 %v1150
    %v1188 = vunpack.c.l.b16 %v1151
    %v1189 = vunpack.c.l.b16 %v1152
    %v1190 = vunpack.c.l.b16 %v1153
    %v1191 = vunpack.c.l.b16 %v1154
    %v1192 = vunpack.c.l.b16 %v1155
    %v1193 = vunpack.c.l.b16 %v1156
    %v1194 = vunpack.c.l.b16 %v1157
    %v1195 = vunpack.c.l.b16 %v1158
    %v1196 = vunpack.c.l.b16 %v1159
    %v1197 = vunpack.c.l.b16 %v1160
    %v1198 = vunpack.c.l.b16 %v1161
    %v1199 = vunpack.c.l.b16 %v1162
    %v1200 = vunpack.c.l.b16 %v1163
    %v1201 = vunpack.c.l.b16 %v1164
    %v1202 = vunpack.c.l.b16 %v1165
    %v1203 = vpack.c.b16 %v1188, %v1187
    %v1204 = vpack.c.b16 %v1190, %v1189
    %v1205 = vpack.c.b16 %v1192, %v1191
    %v1206 = vpack.c.b16 %v1194, %v1193
    %v1207 = vpack.c.b16 %v1196, %v1195
    %v1208 = vpack.c.b16 %v1198, %v1197
    %v1209 = vpack.c.b16 %v1200, %v1199
    %v1210 = vpack.c.b16 %v1202, %v1201
    %1219 = vmatprep.subr.bf16.mxu0 0
    %1220 = vmatpush1.bf16.msra.mxu0 %v1203
    %1221 = vmatprep.subr.bf16.mxu0 0
    %1222 = vmatpush1.bf16.msra.mxu0 %v1204
    %1223 = vmatprep.subr.bf16.mxu0 0
    %1224 = vmatpush1.bf16.msra.mxu0 %v1205
    %1225 = vmatprep.subr.bf16.mxu0 0
    %1226 = vmatpush1.bf16.msra.mxu0 %v1206
    %1227 = vmatprep.subr.bf16.mxu0 0
    %1228 = vmatpush1.bf16.msra.mxu0 %v1207
    %1229 = vmatprep.subr.bf16.mxu0 0
    %1230 = vmatpush1.bf16.msra.mxu0 %v1208
    %1231 = vmatprep.subr.bf16.mxu0 0
    %1232 = vmatpush1.bf16.msra.mxu0 %v1209
    %1233 = vmatprep.subr.bf16.mxu0 0
    %1234 = vmatpush1.bf16.msra.mxu0 %v1210
    %1235 = vmatprep.subr.bf16.mxu0 0
    %1236 = vmatpush1.bf16.msra.mxu0 0
    %1237 = vmatprep.subr.bf16.mxu0 0
    %1238 = vmatpush1.bf16.msra.mxu0 0
    %1239 = vmatprep.subr.bf16.mxu0 0
    %1240 = vmatpush1.bf16.msra.mxu0 0
    %1241 = vmatprep.subr.bf16.mxu0 0
    %1242 = vmatpush1.bf16.msra.mxu0 0
    %1243 = vmatprep.subr.bf16.mxu0 0
    %1244 = vmatpush1.bf16.msra.mxu0 0
    %1245 = vmatprep.subr.bf16.mxu0 0
    %1246 = vmatpush1.bf16.msra.mxu0 0
    %1247 = vmatprep.subr.bf16.mxu0 0
    %1248 = vmatpush1.bf16.msra.mxu0 0
    %1249 = vmatprep.subr.bf16.mxu0 0
    %1250 = vmatpush1.bf16.msra.mxu0 0
    %1251 = vmatprep.mubr.bf16.mxu0 0
    %1252 = vmatmul.mubr.bf16.gmra.mrb[0].mxu0 %v1148
    %v1253 = vpop.f32.mrb[0].mxu0
    %v1254 = vadd.f32 %v1170, %v1253
    %v1255 = vpop.f32.mrb[0].mxu0
    %v1256 = vpop.f32.mrb[0].mxu0
    %v1257 = vpop.f32.mrb[0].mxu0
    %1258 = vdwg.mxu0
    %v1259 = vmax.f32 %v1254, 0.0
    %v1260 = vpack.c.bf16 %v1259, %v1259
    %s1261 = scalar_lea.vmem [#allocation2], 448
    %v1262 = vld [vmem:[%s1261] sm:$0xf]
    %v1263 = vld [vmem:[%s1261 + $0x4] sm:$0xf]
    %v1264 = vld [vmem:[%s1261 + $0x8] sm:$0xf]
    %v1265 = vld [vmem:[%s1261 + $0xc] sm:$0xf]
    %v1266 = vld [vmem:[%s1261 + $0x10] sm:$0xf]
    %v1267 = vld [vmem:[%s1261 + $0x14] sm:$0xf]
    %v1268 = vld [vmem:[%s1261 + $0x18] sm:$0xf]
    %v1269 = vld [vmem:[%s1261 + $0x1c] sm:$0xf]
    %v1270 = vld [vmem:[%s1261 + $0x20] sm:$0xf]
    %v1271 = vld [vmem:[%s1261 + $0x24] sm:$0xf]
    %v1272 = vld [vmem:[%s1261 + $0x28] sm:$0xf]
    %v1273 = vld [vmem:[%s1261 + $0x2c] sm:$0xf]
    %v1274 = vld [vmem:[%s1261 + $0x30] sm:$0xf]
    %v1275 = vld [vmem:[%s1261 + $0x34] sm:$0xf]
    %v1276 = vld [vmem:[%s1261 + $0x38] sm:$0xf]
    %v1277 = vld [vmem:[%s1261 + $0x3c] sm:$0xf]
    %v1278 = vld [vmem:[%s4 + $0x7] sm:$0x1]
    %v1279 = vlaneseq
    %v1280 = vshrl.u32 %v1279, 7
    %v1281 = vsub.s32 0, %v1280
    %v1282 = vrot.slane %v1278, %v1281
    %v1299 = vunpack.c.l.b16 %v1262
    %v1300 = vunpack.c.l.b16 %v1263
    %v1301 = vunpack.c.l.b16 %v1264
    %v1302 = vunpack.c.l.b16 %v1265
    %v1303 = vunpack.c.l.b16 %v1266
    %v1304 = vunpack.c.l.b16 %v1267
    %v1305 = vunpack.c.l.b16 %v1268
    %v1306 = vunpack.c.l.b16 %v1269
    %v1307 = vunpack.c.l.b16 %v1270
    %v1308 = vunpack.c.l.b16 %v1271
    %v1309 = vunpack.c.l.b16 %v1272
    %v1310 = vunpack.c.l.b16 %v1273
    %v1311 = vunpack.c.l.b16 %v1274
    %v1312 = vunpack.c.l.b16 %v1275
    %v1313 = vunpack.c.l.b16 %v1276
    %v1314 = vunpack.c.l.b16 %v1277
    %v1315 = vpack.c.b16 %v1300, %v1299
    %v1316 = vpack.c.b16 %v1302, %v1301
    %v1317 = vpack.c.b16 %v1304, %v1303
    %v1318 = vpack.c.b16 %v1306, %v1305
    %v1319 = vpack.c.b16 %v1308, %v1307
    %v1320 = vpack.c.b16 %v1310, %v1309
    %v1321 = vpack.c.b16 %v1312, %v1311
    %v1322 = vpack.c.b16 %v1314, %v1313
    %1331 = vmatprep.subr.bf16.mxu0 0
    %1332 = vmatpush1.bf16.msra.mxu0 %v1315
    %1333 = vmatprep.subr.bf16.mxu0 0
    %1334 = vmatpush1.bf16.msra.mxu0 %v1316
    %1335 = vmatprep.subr.bf16.mxu0 0
    %1336 = vmatpush1.bf16.msra.mxu0 %v1317
    %1337 = vmatprep.subr.bf16.mxu0 0
    %1338 = vmatpush1.bf16.msra.mxu0 %v1318
    %1339 = vmatprep.subr.bf16.mxu0 0
    %1340 = vmatpush1.bf16.msra.mxu0 %v1319
    %1341 = vmatprep.subr.bf16.mxu0 0
    %1342 = vmatpush1.bf16.msra.mxu0 %v1320
    %1343 = vmatprep.subr.bf16.mxu0 0
    %1344 = vmatpush1.bf16.msra.mxu0 %v1321
    %1345 = vmatprep.subr.bf16.mxu0 0
    %1346 = vmatpush1.bf16.msra.mxu0 %v1322
    %1347 = vmatprep.subr.bf16.mxu0 0
    %1348 = vmatpush1.bf16.msra.mxu0 0
    %1349 = vmatprep.subr.bf16.mxu0 0
    %1350 = vmatpush1.bf16.msra.mxu0 0
    %1351 = vmatprep.subr.bf16.mxu0 0
    %1352 = vmatpush1.bf16.msra.mxu0 0
    %1353 = vmatprep.subr.bf16.mxu0 0
    %1354 = vmatpush1.bf16.msra.mxu0 0
    %1355 = vmatprep.subr.bf16.mxu0 0
    %1356 = vmatpush1.bf16.msra.mxu0 0
    %1357 = vmatprep.subr.bf16.mxu0 0
    %1358 = vmatpush1.bf16.msra.mxu0 0
    %1359 = vmatprep.subr.bf16.mxu0 0
    %1360 = vmatpush1.bf16.msra.mxu0 0
    %1361 = vmatprep.subr.bf16.mxu0 0
    %1362 = vmatpush1.bf16.msra.mxu0 0
    %1363 = vmatprep.mubr.bf16.mxu0 0
    %1364 = vmatmul.mubr.bf16.gmra.mrb[0].mxu0 %v1260
    %v1365 = vpop.f32.mrb[0].mxu0
    %v1366 = vadd.f32 %v1282, %v1365
    %v1367 = vpop.f32.mrb[0].mxu0
    %v1368 = vpop.f32.mrb[0].mxu0
    %v1369 = vpop.f32.mrb[0].mxu0
    %1370 = vdwg.mxu0
    %v1371 = vmax.f32 %v1366, 0.0
    %v1372 = vpack.c.bf16 %v1371, %v1371
    %s1373 = scalar_lea.vmem [#allocation2], 512
    %v1374 = vld [vmem:[%s1373] sm:$0xf]
    %v1375 = vld [vmem:[%s1373 + $0x4] sm:$0xf]
    %v1376 = vld [vmem:[%s1373 + $0x8] sm:$0xf]
    %v1377 = vld [vmem:[%s1373 + $0xc] sm:$0xf]
    %v1378 = vld [vmem:[%s1373 + $0x10] sm:$0xf]
    %v1379 = vld [vmem:[%s1373 + $0x14] sm:$0xf]
    %v1380 = vld [vmem:[%s1373 + $0x18] sm:$0xf]
    %v1381 = vld [vmem:[%s1373 + $0x1c] sm:$0xf]
    %v1382 = vld [vmem:[%s1373 + $0x20] sm:$0xf]
    %v1383 = vld [vmem:[%s1373 + $0x24] sm:$0xf]
    %v1384 = vld [vmem:[%s1373 + $0x28] sm:$0xf]
    %v1385 = vld [vmem:[%s1373 + $0x2c] sm:$0xf]
    %v1386 = vld [vmem:[%s1373 + $0x30] sm:$0xf]
    %v1387 = vld [vmem:[%s1373 + $0x34] sm:$0xf]
    %v1388 = vld [vmem:[%s1373 + $0x38] sm:$0xf]
    %v1389 = vld [vmem:[%s1373 + $0x3c] sm:$0xf]
    %v1390 = vld [vmem:[%s4 + $0x8] sm:$0x1]
    %v1391 = vlaneseq
    %v1392 = vshrl.u32 %v1391, 7
    %v1393 = vsub.s32 0, %v1392
    %v1394 = vrot.slane %v1390, %v1393
    %v1411 = vunpack.c.l.b16 %v1374
    %v1412 = vunpack.c.l.b16 %v1375
    %v1413 = vunpack.c.l.b16 %v1376
    %v1414 = vunpack.c.l.b16 %v1377
    %v1415 = vunpack.c.l.b16 %v1378
    %v1416 = vunpack.c.l.b16 %v1379
    %v1417 = vunpack.c.l.b16 %v1380
    %v1418 = vunpack.c.l.b16 %v1381
    %v1419 = vunpack.c.l.b16 %v1382
    %v1420 = vunpack.c.l.b16 %v1383
    %v1421 = vunpack.c.l.b16 %v1384
    %v1422 = vunpack.c.l.b16 %v1385
    %v1423 = vunpack.c.l.b16 %v1386
    %v1424 = vunpack.c.l.b16 %v1387
    %v1425 = vunpack.c.l.b16 %v1388
    %v1426 = vunpack.c.l.b16 %v1389
    %v1427 = vpack.c.b16 %v1412, %v1411
    %v1428 = vpack.c.b16 %v1414, %v1413
    %v1429 = vpack.c.b16 %v1416, %v1415
    %v1430 = vpack.c.b16 %v1418, %v1417
    %v1431 = vpack.c.b16 %v1420, %v1419
    %v1432 = vpack.c.b16 %v1422, %v1421
    %v1433 = vpack.c.b16 %v1424, %v1423
    %v1434 = vpack.c.b16 %v1426, %v1425
    %1443 = vmatprep.subr.bf16.mxu0 0
    %1444 = vmatpush1.bf16.msra.mxu0 %v1427
    %1445 = vmatprep.subr.bf16.mxu0 0
    %1446 = vmatpush1.bf16.msra.mxu0 %v1428
    %1447 = vmatprep.subr.bf16.mxu0 0
    %1448 = vmatpush1.bf16.msra.mxu0 %v1429
    %1449 = vmatprep.subr.bf16.mxu0 0
    %1450 = vmatpush1.bf16.msra.mxu0 %v1430
    %1451 = vmatprep.subr.bf16.mxu0 0
    %1452 = vmatpush1.bf16.msra.mxu0 %v1431
    %1453 = vmatprep.subr.bf16.mxu0 0
    %1454 = vmatpush1.bf16.msra.mxu0 %v1432
    %1455 = vmatprep.subr.bf16.mxu0 0
    %1456 = vmatpush1.bf16.msra.mxu0 %v1433
    %1457 = vmatprep.subr.bf16.mxu0 0
    %1458 = vmatpush1.bf16.msra.mxu0 %v1434
    %1459 = vmatprep.subr.bf16.mxu0 0
    %1460 = vmatpush1.bf16.msra.mxu0 0
    %1461 = vmatprep.subr.bf16.mxu0 0
    %1462 = vmatpush1.bf16.msra.mxu0 0
    %1463 = vmatprep.subr.bf16.mxu0 0
    %1464 = vmatpush1.bf16.msra.mxu0 0
    %1465 = vmatprep.subr.bf16.mxu0 0
    %1466 = vmatpush1.bf16.msra.mxu0 0
    %1467 = vmatprep.subr.bf16.mxu0 0
    %1468 = vmatpush1.bf16.msra.mxu0 0
    %1469 = vmatprep.subr.bf16.mxu0 0
    %1470 = vmatpush1.bf16.msra.mxu0 0
    %1471 = vmatprep.subr.bf16.mxu0 0
    %1472 = vmatpush1.bf16.msra.mxu0 0
    %1473 = vmatprep.subr.bf16.mxu0 0
    %1474 = vmatpush1.bf16.msra.mxu0 0
    %1475 = vmatprep.mubr.bf16.mxu0 0
    %1476 = vmatmul.mubr.bf16.gmra.mrb[0].mxu0 %v1372
    %v1477 = vpop.f32.mrb[0].mxu0
    %v1478 = vadd.f32 %v1394, %v1477
    %v1479 = vpop.f32.mrb[0].mxu0
    %v1480 = vpop.f32.mrb[0].mxu0
    %v1481 = vpop.f32.mrb[0].mxu0
    %1482 = vdwg.mxu0
    %1483 = vst [vmem:[#allocation5] sm:$0xff] %v1478
    // Predicated region
    $region33: #{tpu_custom_call.1} parent=1 // pred_check
      _
    $region34: #{tpu_custom_call.1} parent=1 // pred_check_branch
      %1485 = sbr.rel (0) target = $region36
    $region35: #{tpu_custom_call.1} parent=1 // pred_region
      %s1487 = ssub.s32 128, 128
      %1488 = vsyncadd [#allocation4], %s1487
      %s1490 = sshll.u32 [#allocation5], 4
      %s1491 = int_to_ptr.vmem [resolvable:$true] %s1490
      %1493 = dma.vmem_to_hbm [thread:$0]  %s1491, 128, %s5, [#allocation4]
    $region36: #{tpu_custom_call.1} parent=1 // pred_fallthru
      _
    // Predicated region
    $region37: #{tpu_custom_call.1} parent=1 // pred_check
      _
    $region38: #{tpu_custom_call.1} parent=1 // pred_check_branch
      %1495 = sbr.rel (0) target = $region40
    $region39: #{tpu_custom_call.1} parent=1 // pred_region
      %1496 = dma.done [#allocation4], 128
    $region40: #{tpu_custom_call.1} parent=1 // pred_fallthru
      _
    %1497 = vsyncpa [#allocation3], 1
    %1498 = vsyncpa [#allocation4], 1

</llo_original>
